<compile_context>
chip_gen: v7x
topology: tpu7x:2x2x1
jax: 0.10.0
libtpu: 0.0.40
codegen_flags: <defaults>
</compile_context>

<pallas_src>
import functools

import jax
import jax.numpy as jnp
from jax.experimental import pallas as pl
from jax.experimental.pallas import tpu as pltpu


# ----------------------------------------------------------------------------
# Shared AFF-weight helper (local_att + global_att -> sigmoid), 2-D [C, S] math
# ----------------------------------------------------------------------------
def _aff_weight(feat, pooled, i_local, i_global, w1_ref, b1_ref, w2_ref, b2_ref):
    """feat: [C, S] tile, pooled: [C, 1] global mean of the *full* feature map.
    Returns sigmoid(local_att(feat) + global_att(pooled)) : [C, S]."""
    w1l = w1_ref[i_local]                 # [inter, C]
    b1l = b1_ref[i_local]                 # [inter, 1]
    w2l = w2_ref[i_local]                 # [C, inter]
    b2l = b2_ref[i_local]                 # [C, 1]
    w1g = w1_ref[i_global]
    b1g = b1_ref[i_global]
    w2g = w2_ref[i_global]
    b2g = b2_ref[i_global]

    # global branch on the pooled vector (tiny mat-vec; negligible)
    hg = jnp.maximum(
        jnp.dot(w1g, pooled, preferred_element_type=jnp.float32) + b1g, 0.0)
    xg = jnp.dot(w2g, hg, preferred_element_type=jnp.float32) + b2g      # [C, 1]

    # local branch; fold xg into the second-conv bias (xl + xg in one add)
    # TODO(synk): on v5e, cast feat/h and the weight slabs to bf16 here (keep f32 accum)
    # if the local matmuls ever become the binding slot; revalidate tolerances.
    h = jnp.maximum(
        jnp.dot(w1l, feat, preferred_element_type=jnp.float32) + b1l, 0.0)  # [inter, S]
    xlg = jnp.dot(w2l, h, preferred_element_type=jnp.float32) + (b2l + xg)  # [C, S]
    # sigmoid(x) == 0.5*(tanh(x/2)+1): exact, one EUP op instead of exp+recip.
    return 0.5 * (jnp.tanh(0.5 * xlg) + 1.0)


# ----------------------------------------------------------------------------
# Fused kernel: one grid step = Bt whole batch images, full HW resident in VMEM
# ----------------------------------------------------------------------------
def multiaff_fused_kernel(x_ref, y_ref, z_ref, w1_ref, b1_ref, w2_ref, b2_ref,
                          o_ref, *, inv_hw, bt):
    # x_ref/y_ref/z_ref/o_ref: [Bt, C, HW_pad]; params packed as
    # w1[4,inter,C], b1[4,inter,1], w2[4,C,inter], b2[4,C,1]
    # branch order: 0 = stage1 local, 1 = stage1 global, 2 = stage2 local, 3 = stage2 global
    for b in range(bt):                                   # small static unroll
        y = y_ref[b]
        z = z_ref[b]
        # ---- stage 1: fuse y and z ----
        fu = y + z
        pooled1 = jnp.sum(fu, axis=-1, keepdims=True) * inv_hw
        wei = _aff_weight(fu, pooled1, 0, 1, w1_ref, b1_ref, w2_ref, b2_ref)
        xo = 2.0 * (z + wei * (y - z))
        # ---- stage 2: fuse x and xo (x loaded late to keep stage-1 live set small) ----
        x = x_ref[b]
        fu2 = x + xo
        pooled2 = jnp.sum(fu2, axis=-1, keepdims=True) * inv_hw
        wei2 = _aff_weight(fu2, pooled2, 2, 3, w1_ref, b1_ref, w2_ref, b2_ref)
        o_ref[b] = (2.0 * (xo + wei2 * (x - xo))).astype(o_ref.dtype)


# ----------------------------------------------------------------------------
# Tiled kernel: grid = (B, 3 phases, HW tiles); pooled sums accumulated across tiles
# ----------------------------------------------------------------------------
def multiaff_tiled_kernel(x_ref, y_ref, z_ref, w1_ref, b1_ref, w2_ref, b2_ref,
                          o_ref, s1_ref, s2_ref, *, inv_hw):
    # data refs: [1, C, hw_tile]; s1/s2: [C, 1] VMEM accumulators (persist across grid).
    p = pl.program_id(1)
    t = pl.program_id(2)

    # phase 0: accumulate sum(y+z) over all HW tiles
    @pl.when(p == 0)
    def _phase0():
        @pl.when(t == 0)
        def _():
            s1_ref[...] = jnp.zeros_like(s1_ref)
        fu = y_ref[0] + z_ref[0]
        s1_ref[...] += jnp.sum(fu, axis=-1, keepdims=True)

    # phase 1: per tile compute wei/xo, accumulate sum(x+xo)
    @pl.when(p == 1)
    def _phase1():
        @pl.when(t == 0)
        def _():
            s2_ref[...] = jnp.zeros_like(s2_ref)
        y = y_ref[0]
        z = z_ref[0]
        pooled1 = s1_ref[...] * inv_hw                      # true-HW mean
        wei = _aff_weight(y + z, pooled1, 0, 1, w1_ref, b1_ref, w2_ref, b2_ref)
        xo = 2.0 * (z + wei * (y - z))
        s2_ref[...] += jnp.sum(x_ref[0] + xo, axis=-1, keepdims=True)

    # phase 2: recompute xo for this tile, apply stage 2, write the output tile
    @pl.when(p == 2)
    def _phase2():
        y = y_ref[0]
        z = z_ref[0]
        pooled1 = s1_ref[...] * inv_hw
        wei = _aff_weight(y + z, pooled1, 0, 1, w1_ref, b1_ref, w2_ref, b2_ref)
        xo = 2.0 * (z + wei * (y - z))
        x = x_ref[0]
        pooled2 = s2_ref[...] * inv_hw
        wei2 = _aff_weight(x + xo, pooled2, 2, 3, w1_ref, b1_ref, w2_ref, b2_ref)
        res = 2.0 * (xo + wei2 * (x - xo))
        o_ref[0] = res.astype(o_ref.dtype)


# ----------------------------------------------------------------------------
# Parameters (deterministic; conv+BN folded, kept in [cout, cin] / [cout, 1])
# ----------------------------------------------------------------------------
def fold_conv_bn(key, cin, cout, eps=1e-5):
    kw, kb, kg, kbe = jax.random.split(key, 4)
    w = 0.1 * jax.random.normal(kw, (cout, cin), jnp.float32)   # 1x1 conv weight
    b = 0.1 * jax.random.normal(kb, (cout,), jnp.float32)
    gamma = 1.0 + 0.1 * jax.random.normal(kg, (cout,), jnp.float32)
    beta = 0.1 * jax.random.normal(kbe, (cout,), jnp.float32)
    running_mean = jnp.zeros((cout,), jnp.float32)
    running_var = jnp.ones((cout,), jnp.float32)
    scale = gamma / jnp.sqrt(running_var + eps)
    w_f = w * scale[:, None]                                    # [cout, cin]  (W @ x form)
    b_f = ((b - running_mean) * scale + beta)[:, None]          # [cout, 1]
    return w_f, b_f


def make_params(channels, r=4, seed=1):
    """4 packed slabs: w1[4,inter,C], b1[4,inter,1], w2[4,C,inter], b2[4,C,1].
    Branch order: stage1 local, stage1 global, stage2 local, stage2 global."""
    inter = channels // r
    keys = jax.random.split(jax.random.PRNGKey(seed), 8)
    w1s, b1s, w2s, b2s = [], [], [], []
    for i in range(4):
        w1, b1 = fold_conv_bn(keys[2 * i], channels, inter)
        w2, b2 = fold_conv_bn(keys[2 * i + 1], inter, channels)
        w1s.append(w1); b1s.append(b1); w2s.append(w2); b2s.append(b2)
    return (jnp.stack(w1s), jnp.stack(b1s), jnp.stack(w2s), jnp.stack(b2s))


# ----------------------------------------------------------------------------
# VMEM sizing helpers
# ----------------------------------------------------------------------------
def _vmem_limit_bytes():
    cap = 64 * 1024 * 1024                       # conservative fallback (v7x physical)
    try:
        cap = int(pltpu.get_tpu_info().vmem_capacity_bytes)
    except Exception:
        pass
    # 75% of physical VMEM (v5e/v6e ~96 MiB, v7x ~48 MiB), capped to leave headroom.
    return int(min(cap * 3 // 4, 100 * 1024 * 1024))


def _choose_bt(B, per_batch_bytes, data_budget):
    """Largest divisor of B that fits the budget while keeping >=2 grid steps (v7x TCs)."""
    max_fit = max(1, int(data_budget // max(per_batch_bytes, 1)))
    cap = B if B < 2 else max(1, B // 2)
    target = min(max_fit, cap)
    bt = 1
    for d in range(1, B + 1):
        if B % d == 0 and d <= target:
            bt = d
    return bt


# ----------------------------------------------------------------------------
# Wrapper
# ----------------------------------------------------------------------------
def multi_aff(x, y, z, params, *, force_hw_tile=None):
    """x, y, z: NCHW float32 arrays [B, C, H, W]. Returns NCHW result."""
    B, C, H, W = x.shape
    HW = H * W
    HW_pad = ((HW + 127) // 128) * 128          # lane-dense spatial axis
    w1_all, b1_all, w2_all, b2_all = params
    inter = w1_all.shape[1]

    # Pure reshape (no transpose): NCHW -> [B, C, HW]; zero-pad spatial axis to 128-multiple.
    xf = x.reshape(B, C, HW)
    yf = y.reshape(B, C, HW)
    zf = z.reshape(B, C, HW)
    if HW_pad != HW:
        pad = ((0, 0), (0, 0), (0, HW_pad - HW))
        xf = jnp.pad(xf, pad)
        yf = jnp.pad(yf, pad)
        zf = jnp.pad(zf, pad)
    inv_hw = 1.0 / float(HW)                    # always divide pooled sums by TRUE HW

    itemsize = 4                                # compute path is f32
    vmem_limit = _vmem_limit_bytes()
    # Param slabs: constant index_map so they are DMA'd once but still double-buffered.
    # TODO(synk): pipeline_mode=pl.Buffered(1) on the param specs would halve this.
    param_vmem = 2 * itemsize * (2 * 4 * inter * C + 4 * (inter + C) * 128)
    data_budget = max(vmem_limit - param_vmem - (2 << 20), 1 << 20)

    # Rough live-set models (I/O double buffers + elementwise temps + hidden activation).
    per_batch_bytes = 20 * C * HW_pad * itemsize
    per_lane128_bytes = 24 * C * 128 * itemsize

    use_tiled = (force_hw_tile is not None) or (per_batch_bytes > data_budget)

    if not use_tiled:
        # ------------------ fused path: whole [Bt, C, HW] per grid step ------------------
        bt = _choose_bt(B, per_batch_bytes, data_budget)
        grid = (B // bt,)
        data_spec = lambda: pl.BlockSpec((bt, C, HW_pad), lambda i: (i, 0, 0))
        param_specs = [
            pl.BlockSpec(w1_all.shape, lambda i: (0, 0, 0)),
            pl.BlockSpec(b1_all.shape, lambda i: (0, 0, 0)),
            pl.BlockSpec(w2_all.shape, lambda i: (0, 0, 0)),
            pl.BlockSpec(b2_all.shape, lambda i: (0, 0, 0)),
        ]
        out = pl.pallas_call(
            functools.partial(multiaff_fused_kernel, inv_hw=inv_hw, bt=bt),
            out_shape=jax.ShapeDtypeStruct((B, C, HW_pad), x.dtype),
            grid_spec=pltpu.PrefetchScalarGridSpec(
                num_scalar_prefetch=0,
                grid=grid,
                in_specs=[data_spec(), data_spec(), data_spec()] + param_specs,
                out_specs=data_spec(),
            ),
            compiler_params=pltpu.CompilerParams(
                dimension_semantics=("parallel",),
                vmem_limit_bytes=vmem_limit,
            ),
        )(xf, yf, zf, w1_all, b1_all, w2_all, b2_all)
    else:
        # ------------------ tiled path: 3-phase grid over (B, phase, HW tiles) -----------
        n128 = HW_pad // 128
        if force_hw_tile is not None:
            hw_tile = int(force_hw_tile)
        else:
            max_k = max(1, int(data_budget // per_lane128_bytes))
            k = 1
            for d in range(1, n128 + 1):
                if n128 % d == 0 and d <= max_k:
                    k = d
            hw_tile = k * 128
        assert hw_tile % 128 == 0 and HW_pad % hw_tile == 0
        n_tiles = HW_pad // hw_tile

        # x unused in phase 0, out unwritten until phase 2: park their block on tile 0
        # during those phases so nothing is re-read / garbage-written.
        x_spec = pl.BlockSpec((1, C, hw_tile), lambda b, p, t: (b, 0, t * ((p + 1) // 2)))
        yz_spec = lambda: pl.BlockSpec((1, C, hw_tile), lambda b, p, t: (b, 0, t))
        out_spec = pl.BlockSpec((1, C, hw_tile), lambda b, p, t: (b, 0, t * (p // 2)))
        param_specs = [
            pl.BlockSpec(w1_all.shape, lambda b, p, t: (0, 0, 0)),
            pl.BlockSpec(b1_all.shape, lambda b, p, t: (0, 0, 0)),
            pl.BlockSpec(w2_all.shape, lambda b, p, t: (0, 0, 0)),
            pl.BlockSpec(b2_all.shape, lambda b, p, t: (0, 0, 0)),
        ]
        out = pl.pallas_call(
            functools.partial(multiaff_tiled_kernel, inv_hw=inv_hw),
            out_shape=jax.ShapeDtypeStruct((B, C, HW_pad), x.dtype),
            grid_spec=pltpu.PrefetchScalarGridSpec(
                num_scalar_prefetch=0,
                grid=(B, 3, n_tiles),
                in_specs=[x_spec, yz_spec(), yz_spec()] + param_specs,
                out_specs=out_spec,
                scratch_shapes=[pltpu.VMEM((C, 1), jnp.float32),
                                pltpu.VMEM((C, 1), jnp.float32)],
            ),
            compiler_params=pltpu.CompilerParams(
                dimension_semantics=("parallel", "arbitrary", "arbitrary"),
                vmem_limit_bytes=vmem_limit,
            ),
        )(xf, yf, zf, w1_all, b1_all, w2_all, b2_all)

    if HW_pad != HW:
        out = out[..., :HW]
    # TODO(synk): emit bf16 output (and accept bf16 inputs) when downstream precision allows;
    # the kernel is HBM-bound, so bf16 I/O is a direct roofline win.
    return out.reshape(B, C, H, W)


# ----------------------------------------------------------------------------
# Pure-JAX reference (same param packing, un-simplified math) for correctness
# ----------------------------------------------------------------------------
def multi_aff_ref(x, y, z, params):
    B, C, H, W = x.shape
    HW = H * W
    xf = x.reshape(B, C, HW)
    yf = y.reshape(B, C, HW)
    zf = z.reshape(B, C, HW)
    w1, b1, w2, b2 = params

    def branch(f, i_l, i_g):
        pooled = jnp.mean(f, axis=-1, keepdims=True)                       # [B, C, 1]
        h = jnp.maximum(jnp.einsum('oc,bcs->bos', w1[i_l], f) + b1[i_l], 0.0)
        xl = jnp.einsum('oi,bis->bos', w2[i_l], h) + b2[i_l]
        hg = jnp.maximum(jnp.einsum('oc,bcs->bos', w1[i_g], pooled) + b1[i_g], 0.0)
        xg = jnp.einsum('oi,bis->bos', w2[i_g], hg) + b2[i_g]
        return jax.nn.sigmoid(xl + xg)

    wei = branch(yf + zf, 0, 1)
    xo = 2.0 * yf * wei + 2.0 * zf * (1.0 - wei)
    wei2 = branch(xf + xo, 2, 3)
    res = 2.0 * xf * wei2 + 2.0 * xo * (1.0 - wei2)
    return res.reshape(B, C, H, W)


if __name__ == "__main__":
    B, C, H, W = 2, 8, 16, 16   # channels=8, r=4 -> inter_channels=2, HW=256
    key = jax.random.PRNGKey(0)
    kx, ky, kz = jax.random.split(key, 3)
    x = jax.random.normal(kx, (B, C, H, W), jnp.float32)
    y = jax.random.normal(ky, (B, C, H, W), jnp.float32)
    z = jax.random.normal(kz, (B, C, H, W), jnp.float32)
    params = make_params(C, r=4)
    ref = multi_aff_ref(x, y, z, params)

    # 1) fused path (whole feature map per grid step)
    out = jax.block_until_ready(multi_aff(x, y, z, params))
    assert out.shape == (B, C, H, W)
    assert jnp.allclose(out, ref, atol=1e-4, rtol=1e-4), "fused path mismatch vs reference"

    # 2) HW-tiled 3-phase path (forced small tile to exercise the production-size path)
    out_t = jax.block_until_ready(multi_aff(x, y, z, params, force_hw_tile=128))
    assert jnp.allclose(out_t, ref, atol=1e-4, rtol=1e-4), "tiled path mismatch vs reference"

    # 3) non-128-multiple spatial size (exercises lane padding + true-HW pooled mean)
    H3 = W3 = 10
    kx3, ky3, kz3 = jax.random.split(jax.random.PRNGKey(3), 3)
    x3 = jax.random.normal(kx3, (B, C, H3, W3), jnp.float32)
    y3 = jax.random.normal(ky3, (B, C, H3, W3), jnp.float32)
    z3 = jax.random.normal(kz3, (B, C, H3, W3), jnp.float32)
    out3 = jax.block_until_ready(multi_aff(x3, y3, z3, params))
    ref3 = multi_aff_ref(x3, y3, z3, params)
    assert jnp.allclose(out3, ref3, atol=1e-4, rtol=1e-4), "padded path mismatch vs reference"

    print("KERNEL_OK")
</pallas_src>

<mosaic_0001>
module attributes {stable_mosaic.version = 11 : i64} {
  func.func @multiaff_fused_kernel(%arg0: i32, %arg1: memref<1x8x256xf32, #tpu.memory_space<vmem>>, %arg2: memref<1x8x256xf32, #tpu.memory_space<vmem>>, %arg3: memref<1x8x256xf32, #tpu.memory_space<vmem>>, %arg4: memref<4x2x8xf32, #tpu.memory_space<vmem>>, %arg5: memref<4x2x1xf32, #tpu.memory_space<vmem>>, %arg6: memref<4x8x2xf32, #tpu.memory_space<vmem>>, %arg7: memref<4x8x1xf32, #tpu.memory_space<vmem>>, %arg8: memref<1x8x256xf32, #tpu.memory_space<vmem>>) attributes {dimension_semantics = [#tpu.dimension_semantics<parallel>], iteration_bounds = array<i64: 2>, scalar_prefetch = 0 : i64, scratch_operands = 0 : i64, tpu.core_type = #tpu.core_type<tc>, window_params = [{transform_indices = @transform_0, window_bounds = array<i64: 1, 8, 256>}, {transform_indices = @transform_1, window_bounds = array<i64: 1, 8, 256>}, {transform_indices = @transform_2, window_bounds = array<i64: 1, 8, 256>}, {pipeline_mode = #tpu.pipeline_mode<synchronous>, transform_indices = @transform_3, window_bounds = array<i64: 4, 2, 8>}, {pipeline_mode = #tpu.pipeline_mode<synchronous>, transform_indices = @transform_4, window_bounds = array<i64: 4, 2, 1>}, {pipeline_mode = #tpu.pipeline_mode<synchronous>, transform_indices = @transform_5, window_bounds = array<i64: 4, 8, 2>}, {pipeline_mode = #tpu.pipeline_mode<synchronous>, transform_indices = @transform_6, window_bounds = array<i64: 4, 8, 1>}, {transform_indices = @transform_7, window_bounds = array<i64: 1, 8, 256>}]} {
    %c0 = arith.constant 0 : index
    %c0_0 = arith.constant 0 : index
    %c0_1 = arith.constant 0 : index
    %0 = vector.load %arg2[%c0, %c0_0, %c0_1] : memref<1x8x256xf32, #tpu.memory_space<vmem>>, vector<1x8x256xf32>
    %1 = vector.shape_cast %0 : vector<1x8x256xf32> to vector<8x256xf32>
    %c0_2 = arith.constant 0 : index
    %c0_3 = arith.constant 0 : index
    %c0_4 = arith.constant 0 : index
    %2 = vector.load %arg3[%c0_2, %c0_3, %c0_4] : memref<1x8x256xf32, #tpu.memory_space<vmem>>, vector<1x8x256xf32>
    %3 = vector.shape_cast %2 : vector<1x8x256xf32> to vector<8x256xf32>
    %4 = arith.addf %1, %3 : vector<8x256xf32>
    %cst = arith.constant dense<0.000000e+00> : vector<8xf32>
    %5 = vector.multi_reduction <add>, %4, %cst [1] : vector<8x256xf32> to vector<8xf32>
    %6 = vector.shape_cast %5 : vector<8xf32> to vector<8x1xf32>
    %cst_5 = arith.constant 3.906250e-03 : f32
    %7 = vector.broadcast %cst_5 : f32 to vector<8x1xf32>
    %8 = arith.mulf %6, %7 : vector<8x1xf32>
    %c0_6 = arith.constant 0 : index
    %c0_7 = arith.constant 0 : index
    %c0_8 = arith.constant 0 : index
    %9 = vector.load %arg4[%c0_6, %c0_7, %c0_8] : memref<4x2x8xf32, #tpu.memory_space<vmem>>, vector<1x2x8xf32>
    %10 = vector.shape_cast %9 : vector<1x2x8xf32> to vector<2x8xf32>
    %c0_9 = arith.constant 0 : index
    %c0_10 = arith.constant 0 : index
    %c0_11 = arith.constant 0 : index
    %11 = vector.load %arg5[%c0_9, %c0_10, %c0_11] : memref<4x2x1xf32, #tpu.memory_space<vmem>>, vector<1x2x1xf32>
    %12 = vector.shape_cast %11 : vector<1x2x1xf32> to vector<2x1xf32>
    %c0_12 = arith.constant 0 : index
    %c0_13 = arith.constant 0 : index
    %c0_14 = arith.constant 0 : index
    %13 = vector.load %arg6[%c0_12, %c0_13, %c0_14] : memref<4x8x2xf32, #tpu.memory_space<vmem>>, vector<1x8x2xf32>
    %14 = vector.shape_cast %13 : vector<1x8x2xf32> to vector<8x2xf32>
    %c0_15 = arith.constant 0 : index
    %c0_16 = arith.constant 0 : index
    %c0_17 = arith.constant 0 : index
    %15 = vector.load %arg7[%c0_15, %c0_16, %c0_17] : memref<4x8x1xf32, #tpu.memory_space<vmem>>, vector<1x8x1xf32>
    %16 = vector.shape_cast %15 : vector<1x8x1xf32> to vector<8x1xf32>
    %c1 = arith.constant 1 : index
    %c0_18 = arith.constant 0 : index
    %c0_19 = arith.constant 0 : index
    %17 = vector.load %arg4[%c1, %c0_18, %c0_19] : memref<4x2x8xf32, #tpu.memory_space<vmem>>, vector<1x2x8xf32>
    %18 = vector.shape_cast %17 : vector<1x2x8xf32> to vector<2x8xf32>
    %c1_20 = arith.constant 1 : index
    %c0_21 = arith.constant 0 : index
    %c0_22 = arith.constant 0 : index
    %19 = vector.load %arg5[%c1_20, %c0_21, %c0_22] : memref<4x2x1xf32, #tpu.memory_space<vmem>>, vector<1x2x1xf32>
    %20 = vector.shape_cast %19 : vector<1x2x1xf32> to vector<2x1xf32>
    %c1_23 = arith.constant 1 : index
    %c0_24 = arith.constant 0 : index
    %c0_25 = arith.constant 0 : index
    %21 = vector.load %arg6[%c1_23, %c0_24, %c0_25] : memref<4x8x2xf32, #tpu.memory_space<vmem>>, vector<1x8x2xf32>
    %22 = vector.shape_cast %21 : vector<1x8x2xf32> to vector<8x2xf32>
    %c1_26 = arith.constant 1 : index
    %c0_27 = arith.constant 0 : index
    %c0_28 = arith.constant 0 : index
    %23 = vector.load %arg7[%c1_26, %c0_27, %c0_28] : memref<4x8x1xf32, #tpu.memory_space<vmem>>, vector<1x8x1xf32>
    %24 = vector.shape_cast %23 : vector<1x8x1xf32> to vector<8x1xf32>
    %cst_29 = arith.constant dense<0.000000e+00> : vector<2x1xf32>
    %25 = tpu.matmul %18, %8, %cst_29 {dimension_numbers = #tpu.dot_dimension_numbers<[1], [0], [0], [1], [0, 0, 1, 1], [], []>} : vector<2x8xf32>, vector<8x1xf32>, vector<2x1xf32> -> vector<2x1xf32>
    %26 = arith.addf %25, %20 : vector<2x1xf32>
    %cst_30 = arith.constant 0.000000e+00 : f32
    %27 = vector.broadcast %cst_30 : f32 to vector<2x1xf32>
    %28 = arith.maximumf %26, %27 : vector<2x1xf32>
    %cst_31 = arith.constant dense<0.000000e+00> : vector<8x1xf32>
    %29 = tpu.matmul %22, %28, %cst_31 {dimension_numbers = #tpu.dot_dimension_numbers<[1], [0], [0], [1], [0, 0, 1, 1], [], []>} : vector<8x2xf32>, vector<2x1xf32>, vector<8x1xf32> -> vector<8x1xf32>
    %30 = arith.addf %29, %24 : vector<8x1xf32>
    %cst_32 = arith.constant dense<0.000000e+00> : vector<2x256xf32>
    %31 = tpu.matmul %10, %4, %cst_32 {dimension_numbers = #tpu.dot_dimension_numbers<[1], [0], [0], [1], [0, 0, 1, 1], [], []>} : vector<2x8xf32>, vector<8x256xf32>, vector<2x256xf32> -> vector<2x256xf32>
    %32 = vector.broadcast %12 : vector<2x1xf32> to vector<2x256xf32>
    %33 = arith.addf %31, %32 : vector<2x256xf32>
    %cst_33 = arith.constant 0.000000e+00 : f32
    %34 = vector.broadcast %cst_33 : f32 to vector<2x256xf32>
    %35 = arith.maximumf %33, %34 : vector<2x256xf32>
    %cst_34 = arith.constant dense<0.000000e+00> : vector<8x256xf32>
    %36 = tpu.matmul %14, %35, %cst_34 {dimension_numbers = #tpu.dot_dimension_numbers<[1], [0], [0], [1], [0, 0, 1, 1], [], []>} : vector<8x2xf32>, vector<2x256xf32>, vector<8x256xf32> -> vector<8x256xf32>
    %37 = arith.addf %16, %30 : vector<8x1xf32>
    %38 = vector.broadcast %37 : vector<8x1xf32> to vector<8x256xf32>
    %39 = arith.addf %36, %38 : vector<8x256xf32>
    %cst_35 = arith.constant 5.000000e-01 : f32
    %40 = vector.broadcast %cst_35 : f32 to vector<8x256xf32>
    %41 = arith.mulf %40, %39 : vector<8x256xf32>
    %42 = math.tanh %41 : vector<8x256xf32>
    %cst_36 = arith.constant 1.000000e+00 : f32
    %43 = vector.broadcast %cst_36 : f32 to vector<8x256xf32>
    %44 = arith.addf %42, %43 : vector<8x256xf32>
    %cst_37 = arith.constant 5.000000e-01 : f32
    %45 = vector.broadcast %cst_37 : f32 to vector<8x256xf32>
    %46 = arith.mulf %45, %44 : vector<8x256xf32>
    %47 = arith.subf %1, %3 : vector<8x256xf32>
    %48 = arith.mulf %46, %47 : vector<8x256xf32>
    %49 = arith.addf %3, %48 : vector<8x256xf32>
    %cst_38 = arith.constant 2.000000e+00 : f32
    %50 = vector.broadcast %cst_38 : f32 to vector<8x256xf32>
    %51 = arith.mulf %50, %49 : vector<8x256xf32>
    %c0_39 = arith.constant 0 : index
    %c0_40 = arith.constant 0 : index
    %c0_41 = arith.constant 0 : index
    %52 = vector.load %arg1[%c0_39, %c0_40, %c0_41] : memref<1x8x256xf32, #tpu.memory_space<vmem>>, vector<1x8x256xf32>
    %53 = vector.shape_cast %52 : vector<1x8x256xf32> to vector<8x256xf32>
    %54 = arith.addf %53, %51 : vector<8x256xf32>
    %cst_42 = arith.constant dense<0.000000e+00> : vector<8xf32>
    %55 = vector.multi_reduction <add>, %54, %cst_42 [1] : vector<8x256xf32> to vector<8xf32>
    %56 = vector.shape_cast %55 : vector<8xf32> to vector<8x1xf32>
    %cst_43 = arith.constant 3.906250e-03 : f32
    %57 = vector.broadcast %cst_43 : f32 to vector<8x1xf32>
    %58 = arith.mulf %56, %57 : vector<8x1xf32>
    %c2 = arith.constant 2 : index
    %c0_44 = arith.constant 0 : index
    %c0_45 = arith.constant 0 : index
    %59 = vector.load %arg4[%c2, %c0_44, %c0_45] : memref<4x2x8xf32, #tpu.memory_space<vmem>>, vector<1x2x8xf32>
    %60 = vector.shape_cast %59 : vector<1x2x8xf32> to vector<2x8xf32>
    %c2_46 = arith.constant 2 : index
    %c0_47 = arith.constant 0 : index
    %c0_48 = arith.constant 0 : index
    %61 = vector.load %arg5[%c2_46, %c0_47, %c0_48] : memref<4x2x1xf32, #tpu.memory_space<vmem>>, vector<1x2x1xf32>
    %62 = vector.shape_cast %61 : vector<1x2x1xf32> to vector<2x1xf32>
    %c2_49 = arith.constant 2 : index
    %c0_50 = arith.constant 0 : index
    %c0_51 = arith.constant 0 : index
    %63 = vector.load %arg6[%c2_49, %c0_50, %c0_51] : memref<4x8x2xf32, #tpu.memory_space<vmem>>, vector<1x8x2xf32>
    %64 = vector.shape_cast %63 : vector<1x8x2xf32> to vector<8x2xf32>
    %c2_52 = arith.constant 2 : index
    %c0_53 = arith.constant 0 : index
    %c0_54 = arith.constant 0 : index
    %65 = vector.load %arg7[%c2_52, %c0_53, %c0_54] : memref<4x8x1xf32, #tpu.memory_space<vmem>>, vector<1x8x1xf32>
    %66 = vector.shape_cast %65 : vector<1x8x1xf32> to vector<8x1xf32>
    %c3 = arith.constant 3 : index
    %c0_55 = arith.constant 0 : index
    %c0_56 = arith.constant 0 : index
    %67 = vector.load %arg4[%c3, %c0_55, %c0_56] : memref<4x2x8xf32, #tpu.memory_space<vmem>>, vector<1x2x8xf32>
    %68 = vector.shape_cast %67 : vector<1x2x8xf32> to vector<2x8xf32>
    %c3_57 = arith.constant 3 : index
    %c0_58 = arith.constant 0 : index
    %c0_59 = arith.constant 0 : index
    %69 = vector.load %arg5[%c3_57, %c0_58, %c0_59] : memref<4x2x1xf32, #tpu.memory_space<vmem>>, vector<1x2x1xf32>
    %70 = vector.shape_cast %69 : vector<1x2x1xf32> to vector<2x1xf32>
    %c3_60 = arith.constant 3 : index
    %c0_61 = arith.constant 0 : index
    %c0_62 = arith.constant 0 : index
    %71 = vector.load %arg6[%c3_60, %c0_61, %c0_62] : memref<4x8x2xf32, #tpu.memory_space<vmem>>, vector<1x8x2xf32>
    %72 = vector.shape_cast %71 : vector<1x8x2xf32> to vector<8x2xf32>
    %c3_63 = arith.constant 3 : index
    %c0_64 = arith.constant 0 : index
    %c0_65 = arith.constant 0 : index
    %73 = vector.load %arg7[%c3_63, %c0_64, %c0_65] : memref<4x8x1xf32, #tpu.memory_space<vmem>>, vector<1x8x1xf32>
    %74 = vector.shape_cast %73 : vector<1x8x1xf32> to vector<8x1xf32>
    %cst_66 = arith.constant dense<0.000000e+00> : vector<2x1xf32>
    %75 = tpu.matmul %68, %58, %cst_66 {dimension_numbers = #tpu.dot_dimension_numbers<[1], [0], [0], [1], [0, 0, 1, 1], [], []>} : vector<2x8xf32>, vector<8x1xf32>, vector<2x1xf32> -> vector<2x1xf32>
    %76 = arith.addf %75, %70 : vector<2x1xf32>
    %cst_67 = arith.constant 0.000000e+00 : f32
    %77 = vector.broadcast %cst_67 : f32 to vector<2x1xf32>
    %78 = arith.maximumf %76, %77 : vector<2x1xf32>
    %cst_68 = arith.constant dense<0.000000e+00> : vector<8x1xf32>
    %79 = tpu.matmul %72, %78, %cst_68 {dimension_numbers = #tpu.dot_dimension_numbers<[1], [0], [0], [1], [0, 0, 1, 1], [], []>} : vector<8x2xf32>, vector<2x1xf32>, vector<8x1xf32> -> vector<8x1xf32>
    %80 = arith.addf %79, %74 : vector<8x1xf32>
    %cst_69 = arith.constant dense<0.000000e+00> : vector<2x256xf32>
    %81 = tpu.matmul %60, %54, %cst_69 {dimension_numbers = #tpu.dot_dimension_numbers<[1], [0], [0], [1], [0, 0, 1, 1], [], []>} : vector<2x8xf32>, vector<8x256xf32>, vector<2x256xf32> -> vector<2x256xf32>
    %82 = vector.broadcast %62 : vector<2x1xf32> to vector<2x256xf32>
    %83 = arith.addf %81, %82 : vector<2x256xf32>
    %cst_70 = arith.constant 0.000000e+00 : f32
    %84 = vector.broadcast %cst_70 : f32 to vector<2x256xf32>
    %85 = arith.maximumf %83, %84 : vector<2x256xf32>
    %cst_71 = arith.constant dense<0.000000e+00> : vector<8x256xf32>
    %86 = tpu.matmul %64, %85, %cst_71 {dimension_numbers = #tpu.dot_dimension_numbers<[1], [0], [0], [1], [0, 0, 1, 1], [], []>} : vector<8x2xf32>, vector<2x256xf32>, vector<8x256xf32> -> vector<8x256xf32>
    %87 = arith.addf %66, %80 : vector<8x1xf32>
    %88 = vector.broadcast %87 : vector<8x1xf32> to vector<8x256xf32>
    %89 = arith.addf %86, %88 : vector<8x256xf32>
    %cst_72 = arith.constant 5.000000e-01 : f32
    %90 = vector.broadcast %cst_72 : f32 to vector<8x256xf32>
    %91 = arith.mulf %90, %89 : vector<8x256xf32>
    %92 = math.tanh %91 : vector<8x256xf32>
    %cst_73 = arith.constant 1.000000e+00 : f32
    %93 = vector.broadcast %cst_73 : f32 to vector<8x256xf32>
    %94 = arith.addf %92, %93 : vector<8x256xf32>
    %cst_74 = arith.constant 5.000000e-01 : f32
    %95 = vector.broadcast %cst_74 : f32 to vector<8x256xf32>
    %96 = arith.mulf %95, %94 : vector<8x256xf32>
    %97 = arith.subf %53, %51 : vector<8x256xf32>
    %98 = arith.mulf %96, %97 : vector<8x256xf32>
    %99 = arith.addf %51, %98 : vector<8x256xf32>
    %cst_75 = arith.constant 2.000000e+00 : f32
    %100 = vector.broadcast %cst_75 : f32 to vector<8x256xf32>
    %101 = arith.mulf %100, %99 : vector<8x256xf32>
    %c0_76 = arith.constant 0 : index
    %c0_77 = arith.constant 0 : index
    %c0_78 = arith.constant 0 : index
    %102 = vector.load %arg8[%c0_76, %c0_77, %c0_78] : memref<1x8x256xf32, #tpu.memory_space<vmem>>, vector<1x8x256xf32>
    %103 = vector.shape_cast %102 : vector<1x8x256xf32> to vector<8x256xf32>
    %104 = vector.shape_cast %101 : vector<8x256xf32> to vector<1x8x256xf32>
    tpu.vector_store %arg8[%c0_76, %c0_77, %c0_78], %104 {strides = array<i32>} : memref<1x8x256xf32, #tpu.memory_space<vmem>>, vector<1x8x256xf32>,
    return
  }
  func.func @transform_0(%arg0: i32) -> (i32, i32, i32) {
    %c0_i32 = arith.constant 0 : i32
    %c0_i32_0 = arith.constant 0 : i32
    %c0_i32_1 = arith.constant 0 : i32
    return %arg0, %c0_i32, %c0_i32_0 : i32, i32, i32
  }
  func.func @transform_1(%arg0: i32) -> (i32, i32, i32) {
    %c0_i32 = arith.constant 0 : i32
    %c0_i32_0 = arith.constant 0 : i32
    %c0_i32_1 = arith.constant 0 : i32
    return %arg0, %c0_i32, %c0_i32_0 : i32, i32, i32
  }
  func.func @transform_2(%arg0: i32) -> (i32, i32, i32) {
    %c0_i32 = arith.constant 0 : i32
    %c0_i32_0 = arith.constant 0 : i32
    %c0_i32_1 = arith.constant 0 : i32
    return %arg0, %c0_i32, %c0_i32_0 : i32, i32, i32
  }
  func.func @transform_3(%arg0: i32) -> (i32, i32, i32) {
    %c0_i32 = arith.constant 0 : i32
    %c0_i32_0 = arith.constant 0 : i32
    %c0_i32_1 = arith.constant 0 : i32
    %c0_i32_2 = arith.constant 0 : i32
    return %c0_i32, %c0_i32_0, %c0_i32_1 : i32, i32, i32
  }
  func.func @transform_4(%arg0: i32) -> (i32, i32, i32) {
    %c0_i32 = arith.constant 0 : i32
    %c0_i32_0 = arith.constant 0 : i32
    %c0_i32_1 = arith.constant 0 : i32
    %c0_i32_2 = arith.constant 0 : i32
    return %c0_i32, %c0_i32_0, %c0_i32_1 : i32, i32, i32
  }
  func.func @transform_5(%arg0: i32) -> (i32, i32, i32) {
    %c0_i32 = arith.constant 0 : i32
    %c0_i32_0 = arith.constant 0 : i32
    %c0_i32_1 = arith.constant 0 : i32
    %c0_i32_2 = arith.constant 0 : i32
    return %c0_i32, %c0_i32_0, %c0_i32_1 : i32, i32, i32
  }
  func.func @transform_6(%arg0: i32) -> (i32, i32, i32) {
    %c0_i32 = arith.constant 0 : i32
    %c0_i32_0 = arith.constant 0 : i32
    %c0_i32_1 = arith.constant 0 : i32
    %c0_i32_2 = arith.constant 0 : i32
    return %c0_i32, %c0_i32_0, %c0_i32_1 : i32, i32, i32
  }
  func.func @transform_7(%arg0: i32) -> (i32, i32, i32) {
    %c0_i32 = arith.constant 0 : i32
    %c0_i32_0 = arith.constant 0 : i32
    %c0_i32_1 = arith.constant 0 : i32
    return %arg0, %c0_i32, %c0_i32_0 : i32, i32, i32
  }
}

</mosaic_0001>

<llo_original>
// kernel: tpu_custom_call.1
$region0: #{tpu_custom_call.1}
  #allocation0 [shape = 'u32[]', space=smem, size = 0x4, offset = 0x4, fixed_abs, tag = 'smem constant byte address 0x4 - core index']
  #allocation1 [shape = 'u32[144,128]{1,0:T(1,128)}', space=vmem, size = 0x12000, scoped, tag = 'internal scratch']
  %s0 = inlined_call_operand.vmem [shape: f32[2,8,256], index: 0, kind: input, shape index: {}]
  %s1 = inlined_call_operand.vmem [shape: f32[2,8,256], index: 1, kind: input, shape index: {}]
  %s2 = inlined_call_operand.hbm [shape: f32[2,8,256], index: 2, kind: input, shape index: {}]
  %s3 = inlined_call_operand.vmem [shape: f32[4,2,8], index: 3, kind: input, shape index: {}]
  %s4 = inlined_call_operand.vmem [shape: f32[4,2,1], index: 4, kind: input, shape index: {}]
  %s5 = inlined_call_operand.vmem [shape: f32[4,8,2], index: 5, kind: input, shape index: {}]
  %s6 = inlined_call_operand.vmem [shape: f32[4,8,1], index: 6, kind: input, shape index: {}]
  %s7 = inlined_call_operand.hbm [shape: f32[2,8,256], index: 7, kind: output, shape index: {}]
  %s8 = sld [smem:[#allocation0]]
  $region65: #{tpu_custom_call.1} parent=0
    _
  %s10 = ssub.s32 1, %s8
  %s11 = scalar_select 0, %s10, %s8
  $region1: #{tpu_custom_call.1} parent=0
    #allocation2 [shape = 'u8[16384]{0}', space=vmem, size = 0x4000, scoped, tag = 'input window, operand 2']
    #allocation3 [shape = 's32[2]{0}', space=sflag, size = 0x8, scoped, tag = 'scoped memory for tpu_custom_call.1']
    #allocation4 [shape = 's32[2]{0}', space=sflag, size = 0x8, scoped, tag = 'scoped memory for tpu_custom_call.1']
    #allocation5 [shape = 'u8[16384]{0}', space=vmem, size = 0x4000, scoped, tag = 'output window, operand 0']
    %12 = vsyncpa [#allocation3], 0
    %s13 = scalar_lea.sflag [#allocation3], 1
    %14 = vsyncpa %s13, 0
    %15 = vsyncpa [#allocation4], 0
    %s16 = scalar_lea.sflag [#allocation4], 1
    %17 = vsyncpa %s16, 0
    loop: start=0, step=1, limit=4
    $region2: #{tpu_custom_call.1} parent=1 // loop_pre_header
      _
    $region3: #{tpu_custom_call.1} parent=1 // loop_header
      %s19 = sphi 0, %s23
      %p20 = scmp.ge.s32.totalorder %s19, 4
      %s29 = sphi 0, %s31
      %s32 = sphi 0, %s29
      %s33 = sphi 0, %s32
      %s49 = sphi 0, %s33
      %s55 = sphi 0, %s57
      %s58 = sphi 0, %s55
      %s59 = sphi 0, %s58
      %s75 = sphi 0, %s59
      %s81 = sphi 0, %s83
      %s84 = sphi 0, %s81
      %s85 = sphi 0, %s84
      %s101 = sphi 0, %s85
      %s105 = sphi 0, %s105
      %s107 = sphi 0, %s105
      %s108 = sphi 0, %s107
      %s122 = sphi 0, %s108
      %s126 = sphi 0, %s126
      %s128 = sphi 0, %s126
      %s129 = sphi 0, %s128
      %s143 = sphi 0, %s129
      %s147 = sphi 0, %s147
      %s149 = sphi 0, %s147
      %s150 = sphi 0, %s149
      %s164 = sphi 0, %s150
      %s168 = sphi 0, %s168
      %s170 = sphi 0, %s168
      %s171 = sphi 0, %s170
      %s185 = sphi 0, %s171
      %s191 = sphi 0, %s193
      %s194 = sphi 0, %s191
      %s195 = sphi 0, %s194
      %s211 = sphi 0, %s195
    $region4: #{tpu_custom_call.1} parent=1 // loop_header_branch
      %22 = sbr.rel (%p20) target = $region8
    $region5: #{tpu_custom_call.1} parent=1 // loop_body
      %s24 = ssub.s32 %s19, 1
      %s25 = ssub.s32 %s19, 2
      %s26 = sadd.s32 %s19, 1
      %s27 = ssub.s32 %s19, %s26
      %p28 = scmp.eq.s32.totalorder %s27, 0
      %s30 = sadd.s32 %s29, 1
      %s31 = scalar_select %p28, %s29, %s30
      %p34 = pneg %p28
      %p35 = scmp.eq.s32.totalorder %s19, 1
      %p36 = por %p34, %p35
      %p37 = scmp.ne.s32.totalorder %s29, %s32
      %p38 = scmp.eq.s32.totalorder %s19, 0
      %p39 = por %p37, %p38
      %p40 = scmp.ne.s32.totalorder %s29, %s32
      %p41 = scmp.eq.s32.totalorder %s24, 1
      %p42 = por %p40, %p41
      %p43 = scmp.ne.s32.totalorder %s32, %s33
      %p44 = scmp.eq.s32.totalorder %s24, 0
      %p45 = por %p43, %p44
      %p46 = scmp.ne.s32.totalorder %s32, %s33
      %p47 = scmp.eq.s32.totalorder %s25, 1
      %p48 = por %p46, %p47
      %p50 = scmp.ne.s32.totalorder %s33, %s49
      %p51 = scmp.eq.s32.totalorder %s25, 0
      %p52 = por %p50, %p51
      %s53 = ssub.s32 %s19, %s26
      %p54 = scmp.eq.s32.totalorder %s53, 0
      %s56 = sadd.s32 %s55, 1
      %s57 = scalar_select %p54, %s55, %s56
      %p60 = pneg %p54
      %p61 = scmp.eq.s32.totalorder %s19, 1
      %p62 = por %p60, %p61
      %p63 = scmp.ne.s32.totalorder %s55, %s58
      %p64 = scmp.eq.s32.totalorder %s19, 0
      %p65 = por %p63, %p64
      %p66 = scmp.ne.s32.totalorder %s55, %s58
      %p67 = scmp.eq.s32.totalorder %s24, 1
      %p68 = por %p66, %p67
      %p69 = scmp.ne.s32.totalorder %s58, %s59
      %p70 = scmp.eq.s32.totalorder %s24, 0
      %p71 = por %p69, %p70
      %p72 = scmp.ne.s32.totalorder %s58, %s59
      %p73 = scmp.eq.s32.totalorder %s25, 1
      %p74 = por %p72, %p73
      %p76 = scmp.ne.s32.totalorder %s59, %s75
      %p77 = scmp.eq.s32.totalorder %s25, 0
      %p78 = por %p76, %p77
      %s79 = ssub.s32 %s19, %s26
      %p80 = scmp.eq.s32.totalorder %s79, 0
      %s82 = sadd.s32 %s81, 1
      %s83 = scalar_select %p80, %s81, %s82
      %p86 = pneg %p80
      %p87 = scmp.eq.s32.totalorder %s19, 1
      %p88 = por %p86, %p87
      %p89 = scmp.ne.s32.totalorder %s81, %s84
      %p90 = scmp.eq.s32.totalorder %s19, 0
      %p91 = por %p89, %p90
      %p92 = scmp.ne.s32.totalorder %s81, %s84
      %p93 = scmp.eq.s32.totalorder %s24, 1
      %p94 = por %p92, %p93
      %p95 = scmp.ne.s32.totalorder %s84, %s85
      %p96 = scmp.eq.s32.totalorder %s24, 0
      %p97 = por %p95, %p96
      %p98 = scmp.ne.s32.totalorder %s84, %s85
      %p99 = scmp.eq.s32.totalorder %s25, 1
      %p100 = por %p98, %p99
      %p102 = scmp.ne.s32.totalorder %s85, %s101
      %p103 = scmp.eq.s32.totalorder %s25, 0
      %p104 = por %p102, %p103
      %s106 = sadd.s32 %s105, 1
      %p109 = scmp.eq.s32.totalorder %s19, 1
      %p110 = scmp.ne.s32.totalorder %s105, %s107
      %p111 = scmp.eq.s32.totalorder %s19, 0
      %p112 = por %p110, %p111
      %p113 = scmp.ne.s32.totalorder %s105, %s107
      %p114 = scmp.eq.s32.totalorder %s24, 1
      %p115 = por %p113, %p114
      %p116 = scmp.ne.s32.totalorder %s107, %s108
      %p117 = scmp.eq.s32.totalorder %s24, 0
      %p118 = por %p116, %p117
      %p119 = scmp.ne.s32.totalorder %s107, %s108
      %p120 = scmp.eq.s32.totalorder %s25, 1
      %p121 = por %p119, %p120
      %p123 = scmp.ne.s32.totalorder %s108, %s122
      %p124 = scmp.eq.s32.totalorder %s25, 0
      %p125 = por %p123, %p124
      %s127 = sadd.s32 %s126, 1
      %p130 = scmp.eq.s32.totalorder %s19, 1
      %p131 = scmp.ne.s32.totalorder %s126, %s128
      %p132 = scmp.eq.s32.totalorder %s19, 0
      %p133 = por %p131, %p132
      %p134 = scmp.ne.s32.totalorder %s126, %s128
      %p135 = scmp.eq.s32.totalorder %s24, 1
      %p136 = por %p134, %p135
      %p137 = scmp.ne.s32.totalorder %s128, %s129
      %p138 = scmp.eq.s32.totalorder %s24, 0
      %p139 = por %p137, %p138
      %p140 = scmp.ne.s32.totalorder %s128, %s129
      %p141 = scmp.eq.s32.totalorder %s25, 1
      %p142 = por %p140, %p141
      %p144 = scmp.ne.s32.totalorder %s129, %s143
      %p145 = scmp.eq.s32.totalorder %s25, 0
      %p146 = por %p144, %p145
      %s148 = sadd.s32 %s147, 1
      %p151 = scmp.eq.s32.totalorder %s19, 1
      %p152 = scmp.ne.s32.totalorder %s147, %s149
      %p153 = scmp.eq.s32.totalorder %s19, 0
      %p154 = por %p152, %p153
      %p155 = scmp.ne.s32.totalorder %s147, %s149
      %p156 = scmp.eq.s32.totalorder %s24, 1
      %p157 = por %p155, %p156
      %p158 = scmp.ne.s32.totalorder %s149, %s150
      %p159 = scmp.eq.s32.totalorder %s24, 0
      %p160 = por %p158, %p159
      %p161 = scmp.ne.s32.totalorder %s149, %s150
      %p162 = scmp.eq.s32.totalorder %s25, 1
      %p163 = por %p161, %p162
      %p165 = scmp.ne.s32.totalorder %s150, %s164
      %p166 = scmp.eq.s32.totalorder %s25, 0
      %p167 = por %p165, %p166
      %s169 = sadd.s32 %s168, 1
      %p172 = scmp.eq.s32.totalorder %s19, 1
      %p173 = scmp.ne.s32.totalorder %s168, %s170
      %p174 = scmp.eq.s32.totalorder %s19, 0
      %p175 = por %p173, %p174
      %p176 = scmp.ne.s32.totalorder %s168, %s170
      %p177 = scmp.eq.s32.totalorder %s24, 1
      %p178 = por %p176, %p177
      %p179 = scmp.ne.s32.totalorder %s170, %s171
      %p180 = scmp.eq.s32.totalorder %s24, 0
      %p181 = por %p179, %p180
      %p182 = scmp.ne.s32.totalorder %s170, %s171
      %p183 = scmp.eq.s32.totalorder %s25, 1
      %p184 = por %p182, %p183
      %p186 = scmp.ne.s32.totalorder %s171, %s185
      %p187 = scmp.eq.s32.totalorder %s25, 0
      %p188 = por %p186, %p187
      %s189 = ssub.s32 %s19, %s26
      %p190 = scmp.eq.s32.totalorder %s189, 0
      %s192 = sadd.s32 %s191, 1
      %s193 = scalar_select %p190, %s191, %s192
      %p196 = pneg %p190
      %p197 = scmp.eq.s32.totalorder %s19, 1
      %p198 = por %p196, %p197
      %p199 = scmp.ne.s32.totalorder %s191, %s194
      %p200 = scmp.eq.s32.totalorder %s19, 0
      %p201 = por %p199, %p200
      %p202 = scmp.ne.s32.totalorder %s191, %s194
      %p203 = scmp.eq.s32.totalorder %s24, 1
      %p204 = por %p202, %p203
      %p205 = scmp.ne.s32.totalorder %s194, %s195
      %p206 = scmp.eq.s32.totalorder %s24, 0
      %p207 = por %p205, %p206
      %p208 = scmp.ne.s32.totalorder %s194, %s195
      %p209 = scmp.eq.s32.totalorder %s25, 1
      %p210 = por %p208, %p209
      %p212 = scmp.ne.s32.totalorder %s195, %s211
      %p213 = scmp.eq.s32.totalorder %s25, 0
      %p214 = por %p212, %p213
      %p215 = scmp.le.s32.totalorder 1, %s19
      %p216 = scmp.lt.s32.totalorder %s19, 3
      %p217 = pnand %p215, %p216
      %p218 = pneg %p217
      // Predicated region
      $region9: #{tpu_custom_call.1} parent=5 // pred_check
        _
      $region10: #{tpu_custom_call.1} parent=5 // pred_check_branch
        %220 = sbr.rel (%p217) target = $region12
      $region11: #{tpu_custom_call.1} parent=5 // pred_region
        %s221 = ssub.s32 %s19, 1
        // Predicated region
        $region13: #{tpu_custom_call.1} parent=11 // pred_check
          %p222 = pneg %p118
        $region14: #{tpu_custom_call.1} parent=11 // pred_check_branch
          %224 = sbr.rel (%p222) target = $region16
        $region15: #{tpu_custom_call.1} parent=11 // pred_region
          _
        $region16: #{tpu_custom_call.1} parent=11 // pred_fallthru
          _
        // Predicated region
        $region17: #{tpu_custom_call.1} parent=11 // pred_check
          %p225 = pneg %p139
        $region18: #{tpu_custom_call.1} parent=11 // pred_check_branch
          %227 = sbr.rel (%p225) target = $region20
        $region19: #{tpu_custom_call.1} parent=11 // pred_region
          _
        $region20: #{tpu_custom_call.1} parent=11 // pred_fallthru
          _
        // Predicated region
        $region21: #{tpu_custom_call.1} parent=11 // pred_check
          %p228 = pneg %p160
        $region22: #{tpu_custom_call.1} parent=11 // pred_check_branch
          %230 = sbr.rel (%p228) target = $region24
        $region23: #{tpu_custom_call.1} parent=11 // pred_region
          _
        $region24: #{tpu_custom_call.1} parent=11 // pred_fallthru
          _
        // Predicated region
        $region25: #{tpu_custom_call.1} parent=11 // pred_check
          %p231 = pneg %p181
        $region26: #{tpu_custom_call.1} parent=11 // pred_check_branch
          %233 = sbr.rel (%p231) target = $region28
        $region27: #{tpu_custom_call.1} parent=11 // pred_region
          _
        $region28: #{tpu_custom_call.1} parent=11 // pred_fallthru
          _
      $region12: #{tpu_custom_call.1} parent=5 // pred_fallthru
        _
      %p234 = scmp.lt.s32.totalorder %s19, 2
      // Predicated region
      $region29: #{tpu_custom_call.1} parent=5 // pred_check
        %p235 = pneg %p234
      $region30: #{tpu_custom_call.1} parent=5 // pred_check_branch
        %237 = sbr.rel (%p235) target = $region32
      $region31: #{tpu_custom_call.1} parent=5 // pred_region
        // Predicated region
        $region33: #{tpu_custom_call.1} parent=31 // pred_check
          %p238 = pneg %p39
        $region34: #{tpu_custom_call.1} parent=31 // pred_check_branch
          %240 = sbr.rel (%p238) target = $region36
        $region35: #{tpu_custom_call.1} parent=31 // pred_region
          %p241 = scmp.lt.s32.totalorder %s19, 1
          %s242 = scalar_select %p241, %s19, 1
          %s243 = smul.addr %s242, 2
          %s244 = smul.addr %s243, 8
          %s245 = scalar_lea.vmem %s0, %s244
        $region36: #{tpu_custom_call.1} parent=31 // pred_fallthru
          _
        // Predicated region
        $region37: #{tpu_custom_call.1} parent=31 // pred_check
          %p246 = pneg %p65
        $region38: #{tpu_custom_call.1} parent=31 // pred_check_branch
          %248 = sbr.rel (%p246) target = $region40
        $region39: #{tpu_custom_call.1} parent=31 // pred_region
          %p249 = scmp.lt.s32.totalorder %s19, 1
          %s250 = scalar_select %p249, %s19, 1
          %s251 = smul.addr %s250, 2
          %s252 = smul.addr %s251, 8
          %s253 = scalar_lea.vmem %s1, %s252
        $region40: #{tpu_custom_call.1} parent=31 // pred_fallthru
          _
        // Predicated region
        $region41: #{tpu_custom_call.1} parent=31 // pred_check
          %p254 = pneg %p91
        $region42: #{tpu_custom_call.1} parent=31 // pred_check_branch
          %256 = sbr.rel (%p254) target = $region44
        $region43: #{tpu_custom_call.1} parent=31 // pred_region
          %s257 = sand.u32 %s81, 1
          %s258 = scalar_lea.sflag [#allocation3], %s257
          %s259 = sand.u32 %s81, 1
          %s260 = smul.addr %s259, 16
          %s261 = scalar_lea.vmem [#allocation2], %s260
          %s263 = ssub.s32 256, 256
          %264 = vsyncadd %s258, %s263
          %s265 = smul.addr %s19, 2
          %s266 = smul.addr %s265, 128
          %s267 = scalar_lea.hbm %s2, %s266
          %s269 = sshll.u32 %s261, 4
          %s270 = int_to_ptr.vmem [resolvable:$true] %s269
          %272 = dma.hbm_to_vmem [thread:$0]  %s267, 256, %s270, %s258
        $region44: #{tpu_custom_call.1} parent=31 // pred_fallthru
          _
      $region32: #{tpu_custom_call.1} parent=5 // pred_fallthru
        _
      %p273 = scmp.le.s32.totalorder 1, %s19
      %p274 = scmp.lt.s32.totalorder %s19, 3
      %p275 = pnand %p273, %p274
      %p276 = pneg %p275
      // Predicated region
      $region45: #{tpu_custom_call.1} parent=5 // pred_check
        _
      $region46: #{tpu_custom_call.1} parent=5 // pred_check_branch
        %278 = sbr.rel (%p275) target = $region48
      $region47: #{tpu_custom_call.1} parent=5 // pred_region
        %s279 = ssub.s32 %s19, 1
        %s280 = sand.u32 %s84, 1
        %s281 = scalar_lea.sflag [#allocation3], %s280
        %s282 = sand.u32 %s84, 1
        %s283 = smul.addr %s282, 16
        %s284 = scalar_lea.vmem [#allocation2], %s283
        // Predicated region
        $region49: #{tpu_custom_call.1} parent=47 // pred_check
          %p285 = pneg %p97
        $region50: #{tpu_custom_call.1} parent=47 // pred_check_branch
          %287 = sbr.rel (%p285) target = $region52
        $region51: #{tpu_custom_call.1} parent=47 // pred_region
          %288 = dma.done %s281, 256
        $region52: #{tpu_custom_call.1} parent=47 // pred_fallthru
          _
        %p289 = scmp.lt.s32.totalorder %s24, 1
        %s290 = scalar_select %p289, %s24, 1
        %s291 = smul.addr %s290, 2
        %s292 = smul.addr %s291, 8
        %s293 = scalar_lea.vmem %s0, %s292
        %p294 = pneg %p45
        %p295 = pneg %p42
        %p296 = scmp.lt.s32.totalorder %s24, 1
        %s297 = scalar_select %p296, %s24, 1
        %s298 = smul.addr %s297, 2
        %s299 = smul.addr %s298, 8
        %s300 = scalar_lea.vmem %s1, %s299
        %p301 = pneg %p71
        %p302 = pneg %p68
        %s303 = sand.u32 %s84, 1
        %s304 = scalar_lea.sflag [#allocation3], %s303
        %s305 = sand.u32 %s84, 1
        %s306 = smul.addr %s305, 16
        %s307 = scalar_lea.vmem [#allocation2], %s306
        %p308 = pneg %p97
        %p309 = pneg %p94
        %p310 = pneg %p118
        %p311 = pneg %p115
        %p312 = pneg %p139
        %p313 = pneg %p136
        %p314 = pneg %p160
        %p315 = pneg %p157
        %p316 = pneg %p181
        %p317 = pneg %p178
        %p318 = pneg %p207
        %p319 = pneg %p204
        %s320 = sand.u32 %s194, 1
        %s321 = scalar_lea.sflag [#allocation4], %s320
        %s322 = sand.u32 %s194, 1
        %s323 = smul.addr %s322, 16
        %s324 = scalar_lea.vmem [#allocation5], %s323
        %p325 = scmp.lt.s32.totalorder %s24, 1
        %s326 = scalar_select %p325, %s24, 1
        %s327 = smul.addr %s326, 2
        %s328 = smul.addr %s327, 8
        %s329 = scalar_lea.vmem %s0, %s328
        %p330 = scmp.lt.s32.totalorder %s24, 1
        %s331 = scalar_select %p330, %s24, 1
        %s332 = smul.addr %s331, 2
        %s333 = smul.addr %s332, 8
        %s334 = scalar_lea.vmem %s1, %s333
        %v335 = vld [vmem:[%s334] sm:$0xff]
        %v336 = vld [vmem:[%s334 + $0x8] sm:$0xff]
        %v337 = vld [vmem:[%s284] sm:$0xff]
        %v338 = vld [vmem:[%s284 + $0x8] sm:$0xff]
        %v339 = vadd.f32 %v335, %v337
        %v340 = vadd.f32 %v336, %v338
        %v341 = vadd.f32 %v339, %v340
        %342 = vadd.xlane.f32.xlu0 %v341
        %v343 = vpop.xlane.xlu0 %342
        %v344 = vmul.f32 %v343, 0.00390625
        %v345 = vld [vmem:[%s3] sm:$0x3]
        %v346 = vld [vmem:[%s4] sm:$0x3]
        %v347 = vld [vmem:[%s5] sm:$0xff]
        %v348 = vld [vmem:[%s6] sm:$0xff]
        %s349 = scalar_lea.vmem %s3, 2
        %v350 = vld [vmem:[%s349] sm:$0x3]
        %s351 = scalar_lea.vmem %s4, 2
        %v352 = vld [vmem:[%s351] sm:$0x3]
        %s353 = scalar_lea.vmem %s5, 8
        %v354 = vld [vmem:[%s353] sm:$0xff]
        %s355 = scalar_lea.vmem %s6, 8
        %v356 = vld [vmem:[%s355] sm:$0xff]
        %vm357 = vcmask 64512
        %v359 = vsel %vm357, %v350, 0
        %361 = vmatprep.subr.mxu0 0.0
        %362 = vmatpush1.msra.mxu0 %v344
        %363 = vmatprep.subr.mxu0 0.0
        %364 = vmatpush1.msra.mxu0 0.0
        %365 = vmatprep.subr.mxu0 0.0
        %366 = vmatpush1.msra.mxu0 0.0
        %367 = vmatprep.subr.mxu0 0.0
        %368 = vmatpush1.msra.mxu0 0.0
        %369 = vmatprep.subr.mxu0 0.0
        %370 = vmatpush1.msra.mxu0 0.0
        %371 = vmatprep.subr.mxu0 0.0
        %372 = vmatpush1.msra.mxu0 0.0
        %373 = vmatprep.subr.mxu0 0.0
        %374 = vmatpush1.msra.mxu0 0.0
        %375 = vmatprep.subr.mxu0 0.0
        %376 = vmatpush1.msra.mxu0 0.0
        %377 = vmatprep.subr.mxu0 0.0
        %378 = vmatpush1.msra.mxu0 0.0
        %379 = vmatprep.subr.mxu0 0.0
        %380 = vmatpush1.msra.mxu0 0.0
        %381 = vmatprep.subr.mxu0 0.0
        %382 = vmatpush1.msra.mxu0 0.0
        %383 = vmatprep.subr.mxu0 0.0
        %384 = vmatpush1.msra.mxu0 0.0
        %385 = vmatprep.subr.mxu0 0.0
        %386 = vmatpush1.msra.mxu0 0.0
        %387 = vmatprep.subr.mxu0 0.0
        %388 = vmatpush1.msra.mxu0 0.0
        %389 = vmatprep.subr.mxu0 0.0
        %390 = vmatpush1.msra.mxu0 0.0
        %391 = vmatprep.subr.mxu0 0.0
        %392 = vmatpush1.msra.mxu0 0.0
        %393 = vmatprep.subr.mxu0 0.0
        %394 = vmatpush1.msra.mxu0 0.0
        %395 = vmatprep.subr.mxu0 0.0
        %396 = vmatpush1.msra.mxu0 0.0
        %397 = vmatprep.subr.mxu0 0.0
        %398 = vmatpush1.msra.mxu0 0.0
        %399 = vmatprep.subr.mxu0 0.0
        %400 = vmatpush1.msra.mxu0 0.0
        %401 = vmatprep.subr.mxu0 0.0
        %402 = vmatpush1.msra.mxu0 0.0
        %403 = vmatprep.subr.mxu0 0.0
        %404 = vmatpush1.msra.mxu0 0.0
        %405 = vmatprep.subr.mxu0 0.0
        %406 = vmatpush1.msra.mxu0 0.0
        %407 = vmatprep.subr.mxu0 0.0
        %408 = vmatpush1.msra.mxu0 0.0
        %409 = vmatprep.subr.mxu0 0.0
        %410 = vmatpush1.msra.mxu0 0.0
        %411 = vmatprep.subr.mxu0 0.0
        %412 = vmatpush1.msra.mxu0 0.0
        %413 = vmatprep.subr.mxu0 0.0
        %414 = vmatpush1.msra.mxu0 0.0
        %415 = vmatprep.subr.mxu0 0.0
        %416 = vmatpush1.msra.mxu0 0.0
        %417 = vmatprep.subr.mxu0 0.0
        %418 = vmatpush1.msra.mxu0 0.0
        %419 = vmatprep.subr.mxu0 0.0
        %420 = vmatpush1.msra.mxu0 0.0
        %421 = vmatprep.subr.mxu0 0.0
        %422 = vmatpush1.msra.mxu0 0.0
        %423 = vmatprep.subr.mxu0 0.0
        %424 = vmatpush1.msra.mxu0 0.0
        %425 = vmatprep.mubr.f32.mxu0 0.0
        %426 = vmatmul.mubr.f32.gmra.mrb[0].mxu0 %v359
        %v427 = vpop.f32.mrb[0].mxu0
        %v428 = vadd.f32 %v352, %v427
        %v429 = vpop.f32.mrb[0].mxu0
        %430 = vdwg.mxu0
        %v431 = vmax.f32 %v428, 0.0
        %vm432 = vcmask 15360
        %v434 = vsel %vm432, %v354, 0
        %vm436 = vcmask 1041408
        %v438 = vsel %vm436, %v431, 0
        %440 = vmatprep.subr.mxu0 0.0
        %441 = vmatpush1.msra.mxu0 %v438
        %442 = vmatprep.subr.mxu0 0.0
        %443 = vmatpush1.msra.mxu0 0.0
        %444 = vmatprep.subr.mxu0 0.0
        %445 = vmatpush1.msra.mxu0 0.0
        %446 = vmatprep.subr.mxu0 0.0
        %447 = vmatpush1.msra.mxu0 0.0
        %448 = vmatprep.subr.mxu0 0.0
        %449 = vmatpush1.msra.mxu0 0.0
        %450 = vmatprep.subr.mxu0 0.0
        %451 = vmatpush1.msra.mxu0 0.0
        %452 = vmatprep.subr.mxu0 0.0
        %453 = vmatpush1.msra.mxu0 0.0
        %454 = vmatprep.subr.mxu0 0.0
        %455 = vmatpush1.msra.mxu0 0.0
        %456 = vmatprep.subr.mxu0 0.0
        %457 = vmatpush1.msra.mxu0 0.0
        %458 = vmatprep.subr.mxu0 0.0
        %459 = vmatpush1.msra.mxu0 0.0
        %460 = vmatprep.subr.mxu0 0.0
        %461 = vmatpush1.msra.mxu0 0.0
        %462 = vmatprep.subr.mxu0 0.0
        %463 = vmatpush1.msra.mxu0 0.0
        %464 = vmatprep.subr.mxu0 0.0
        %465 = vmatpush1.msra.mxu0 0.0
        %466 = vmatprep.subr.mxu0 0.0
        %467 = vmatpush1.msra.mxu0 0.0
        %468 = vmatprep.subr.mxu0 0.0
        %469 = vmatpush1.msra.mxu0 0.0
        %470 = vmatprep.subr.mxu0 0.0
        %471 = vmatpush1.msra.mxu0 0.0
        %472 = vmatprep.subr.mxu0 0.0
        %473 = vmatpush1.msra.mxu0 0.0
        %474 = vmatprep.subr.mxu0 0.0
        %475 = vmatpush1.msra.mxu0 0.0
        %476 = vmatprep.subr.mxu0 0.0
        %477 = vmatpush1.msra.mxu0 0.0
        %478 = vmatprep.subr.mxu0 0.0
        %479 = vmatpush1.msra.mxu0 0.0
        %480 = vmatprep.subr.mxu0 0.0
        %481 = vmatpush1.msra.mxu0 0.0
        %482 = vmatprep.subr.mxu0 0.0
        %483 = vmatpush1.msra.mxu0 0.0
        %484 = vmatprep.subr.mxu0 0.0
        %485 = vmatpush1.msra.mxu0 0.0
        %486 = vmatprep.subr.mxu0 0.0
        %487 = vmatpush1.msra.mxu0 0.0
        %488 = vmatprep.subr.mxu0 0.0
        %489 = vmatpush1.msra.mxu0 0.0
        %490 = vmatprep.subr.mxu0 0.0
        %491 = vmatpush1.msra.mxu0 0.0
        %492 = vmatprep.subr.mxu0 0.0
        %493 = vmatpush1.msra.mxu0 0.0
        %494 = vmatprep.subr.mxu0 0.0
        %495 = vmatpush1.msra.mxu0 0.0
        %496 = vmatprep.subr.mxu0 0.0
        %497 = vmatpush1.msra.mxu0 0.0
        %498 = vmatprep.subr.mxu0 0.0
        %499 = vmatpush1.msra.mxu0 0.0
        %500 = vmatprep.subr.mxu0 0.0
        %501 = vmatpush1.msra.mxu0 0.0
        %502 = vmatprep.subr.mxu0 0.0
        %503 = vmatpush1.msra.mxu0 0.0
        %504 = vmatprep.mubr.f32.mxu0 0.0
        %505 = vmatmul.mubr.f32.gmra.mrb[0].mxu0 %v434
        %v506 = vpop.f32.mrb[0].mxu0
        %v507 = vadd.f32 %v356, %v506
        %v508 = vpop.f32.mrb[0].mxu0
        %509 = vdwg.mxu0
        %511 = vset.pattern.permute.xlu0 0
        %512 = vperm.xlu0 %511, %v346
        %v513 = vpop.permute.xlu0 %512
        %v516 = vsel %vm357, %v345, 0
        %518 = vmatprep.subr.mxu0 %v340
        %519 = vmatpush1.msra.mxu0 %v339
        %520 = vmatprep.subr.mxu0 0.0
        %521 = vmatpush1.msra.mxu0 0.0
        %522 = vmatprep.subr.mxu0 0.0
        %523 = vmatpush1.msra.mxu0 0.0
        %524 = vmatprep.subr.mxu0 0.0
        %525 = vmatpush1.msra.mxu0 0.0
        %526 = vmatprep.subr.mxu0 0.0
        %527 = vmatpush1.msra.mxu0 0.0
        %528 = vmatprep.subr.mxu0 0.0
        %529 = vmatpush1.msra.mxu0 0.0
        %530 = vmatprep.subr.mxu0 0.0
        %531 = vmatpush1.msra.mxu0 0.0
        %532 = vmatprep.subr.mxu0 0.0
        %533 = vmatpush1.msra.mxu0 0.0
        %534 = vmatprep.subr.mxu0 0.0
        %535 = vmatpush1.msra.mxu0 0.0
        %536 = vmatprep.subr.mxu0 0.0
        %537 = vmatpush1.msra.mxu0 0.0
        %538 = vmatprep.subr.mxu0 0.0
        %539 = vmatpush1.msra.mxu0 0.0
        %540 = vmatprep.subr.mxu0 0.0
        %541 = vmatpush1.msra.mxu0 0.0
        %542 = vmatprep.subr.mxu0 0.0
        %543 = vmatpush1.msra.mxu0 0.0
        %544 = vmatprep.subr.mxu0 0.0
        %545 = vmatpush1.msra.mxu0 0.0
        %546 = vmatprep.subr.mxu0 0.0
        %547 = vmatpush1.msra.mxu0 0.0
        %548 = vmatprep.subr.mxu0 0.0
        %549 = vmatpush1.msra.mxu0 0.0
        %550 = vmatprep.subr.mxu0 0.0
        %551 = vmatpush1.msra.mxu0 0.0
        %552 = vmatprep.subr.mxu0 0.0
        %553 = vmatpush1.msra.mxu0 0.0
        %554 = vmatprep.subr.mxu0 0.0
        %555 = vmatpush1.msra.mxu0 0.0
        %556 = vmatprep.subr.mxu0 0.0
        %557 = vmatpush1.msra.mxu0 0.0
        %558 = vmatprep.subr.mxu0 0.0
        %559 = vmatpush1.msra.mxu0 0.0
        %560 = vmatprep.subr.mxu0 0.0
        %561 = vmatpush1.msra.mxu0 0.0
        %562 = vmatprep.subr.mxu0 0.0
        %563 = vmatpush1.msra.mxu0 0.0
        %564 = vmatprep.subr.mxu0 0.0
        %565 = vmatpush1.msra.mxu0 0.0
        %566 = vmatprep.subr.mxu0 0.0
        %567 = vmatpush1.msra.mxu0 0.0
        %568 = vmatprep.subr.mxu0 0.0
        %569 = vmatpush1.msra.mxu0 0.0
        %570 = vmatprep.subr.mxu0 0.0
        %571 = vmatpush1.msra.mxu0 0.0
        %572 = vmatprep.subr.mxu0 0.0
        %573 = vmatpush1.msra.mxu0 0.0
        %574 = vmatprep.subr.mxu0 0.0
        %575 = vmatpush1.msra.mxu0 0.0
        %576 = vmatprep.subr.mxu0 0.0
        %577 = vmatpush1.msra.mxu0 0.0
        %578 = vmatprep.subr.mxu0 0.0
        %579 = vmatpush1.msra.mxu0 0.0
        %580 = vmatprep.subr.mxu0 0.0
        %581 = vmatpush1.msra.mxu0 0.0
        %582 = vmatprep.mubr.f32.mxu0 0.0
        %583 = vmatmul.mubr.f32.gmra.mrb[0].mxu0 %v516
        %v584 = vpop.f32.mrb[0].mxu0
        %v585 = vadd.f32 %v513, %v584
        %v586 = vpop.f32.mrb[0].mxu0
        %v587 = vadd.f32 %v513, %v586
        %588 = vdwg.mxu0
        %v589 = vmax.f32 %v585, 0.0
        %v590 = vmax.f32 %v587, 0.0
        %v591 = vadd.f32 %v348, %v507
        %593 = vset.pattern.permute.xlu0 0
        %594 = vperm.xlu0 %593, %v591
        %v595 = vpop.permute.xlu0 %594
        %v598 = vsel %vm432, %v347, 0
        %v601 = vsel %vm436, %v589, 0
        %v604 = vsel %vm436, %v590, 0
        %606 = vmatprep.subr.mxu0 %v604
        %607 = vmatpush1.msra.mxu0 %v601
        %608 = vmatprep.subr.mxu0 0.0
        %609 = vmatpush1.msra.mxu0 0.0
        %610 = vmatprep.subr.mxu0 0.0
        %611 = vmatpush1.msra.mxu0 0.0
        %612 = vmatprep.subr.mxu0 0.0
        %613 = vmatpush1.msra.mxu0 0.0
        %614 = vmatprep.subr.mxu0 0.0
        %615 = vmatpush1.msra.mxu0 0.0
        %616 = vmatprep.subr.mxu0 0.0
        %617 = vmatpush1.msra.mxu0 0.0
        %618 = vmatprep.subr.mxu0 0.0
        %619 = vmatpush1.msra.mxu0 0.0
        %620 = vmatprep.subr.mxu0 0.0
        %621 = vmatpush1.msra.mxu0 0.0
        %622 = vmatprep.subr.mxu0 0.0
        %623 = vmatpush1.msra.mxu0 0.0
        %624 = vmatprep.subr.mxu0 0.0
        %625 = vmatpush1.msra.mxu0 0.0
        %626 = vmatprep.subr.mxu0 0.0
        %627 = vmatpush1.msra.mxu0 0.0
        %628 = vmatprep.subr.mxu0 0.0
        %629 = vmatpush1.msra.mxu0 0.0
        %630 = vmatprep.subr.mxu0 0.0
        %631 = vmatpush1.msra.mxu0 0.0
        %632 = vmatprep.subr.mxu0 0.0
        %633 = vmatpush1.msra.mxu0 0.0
        %634 = vmatprep.subr.mxu0 0.0
        %635 = vmatpush1.msra.mxu0 0.0
        %636 = vmatprep.subr.mxu0 0.0
        %637 = vmatpush1.msra.mxu0 0.0
        %638 = vmatprep.subr.mxu0 0.0
        %639 = vmatpush1.msra.mxu0 0.0
        %640 = vmatprep.subr.mxu0 0.0
        %641 = vmatpush1.msra.mxu0 0.0
        %642 = vmatprep.subr.mxu0 0.0
        %643 = vmatpush1.msra.mxu0 0.0
        %644 = vmatprep.subr.mxu0 0.0
        %645 = vmatpush1.msra.mxu0 0.0
        %646 = vmatprep.subr.mxu0 0.0
        %647 = vmatpush1.msra.mxu0 0.0
        %648 = vmatprep.subr.mxu0 0.0
        %649 = vmatpush1.msra.mxu0 0.0
        %650 = vmatprep.subr.mxu0 0.0
        %651 = vmatpush1.msra.mxu0 0.0
        %652 = vmatprep.subr.mxu0 0.0
        %653 = vmatpush1.msra.mxu0 0.0
        %654 = vmatprep.subr.mxu0 0.0
        %655 = vmatpush1.msra.mxu0 0.0
        %656 = vmatprep.subr.mxu0 0.0
        %657 = vmatpush1.msra.mxu0 0.0
        %658 = vmatprep.subr.mxu0 0.0
        %659 = vmatpush1.msra.mxu0 0.0
        %660 = vmatprep.subr.mxu0 0.0
        %661 = vmatpush1.msra.mxu0 0.0
        %662 = vmatprep.subr.mxu0 0.0
        %663 = vmatpush1.msra.mxu0 0.0
        %664 = vmatprep.subr.mxu0 0.0
        %665 = vmatpush1.msra.mxu0 0.0
        %666 = vmatprep.subr.mxu0 0.0
        %667 = vmatpush1.msra.mxu0 0.0
        %668 = vmatprep.subr.mxu0 0.0
        %669 = vmatpush1.msra.mxu0 0.0
        %670 = vmatprep.mubr.f32.mxu0 0.0
        %671 = vmatmul.mubr.f32.gmra.mrb[0].mxu0 %v598
        %v672 = vpop.f32.mrb[0].mxu0
        %v673 = vadd.f32 %v595, %v672
        %v674 = vpop.f32.mrb[0].mxu0
        %v675 = vadd.f32 %v595, %v674
        %676 = vdwg.mxu0
        %v677 = vmul.f32 %v673, 0.5
        %v678 = vmul.f32 %v675, 0.5
        %v679 = vtanh.pop %v677
        %v680 = vtanh.pop %v678
        %v681 = vadd.f32 %v679, 1.0
        %v682 = vadd.f32 %v680, 1.0
        %v683 = vmul.f32 %v681, 0.5
        %v684 = vmul.f32 %v682, 0.5
        %v685 = vsub.f32 %v335, %v337
        %v686 = vsub.f32 %v336, %v338
        %v687 = vmul.f32 %v683, %v685
        %v688 = vmul.f32 %v684, %v686
        %v689 = vadd.f32 %v337, %v687
        %v690 = vadd.f32 %v338, %v688
        %v691 = vmul.f32 %v689, 2.0
        %v692 = vmul.f32 %v690, 2.0
        %v693 = vld [vmem:[%s329] sm:$0xff]
        %v694 = vld [vmem:[%s329 + $0x8] sm:$0xff]
        %v695 = vadd.f32 %v693, %v691
        %v696 = vadd.f32 %v694, %v692
        %v697 = vadd.f32 %v695, %v696
        %698 = vadd.xlane.f32.xlu0 %v697
        %v699 = vpop.xlane.xlu0 %698
        %v700 = vmul.f32 %v699, 0.00390625
        %s701 = scalar_lea.vmem %s3, 4
        %v702 = vld [vmem:[%s701] sm:$0x3]
        %s703 = scalar_lea.vmem %s4, 4
        %v704 = vld [vmem:[%s703] sm:$0x3]
        %s705 = scalar_lea.vmem %s5, 16
        %v706 = vld [vmem:[%s705] sm:$0xff]
        %s707 = scalar_lea.vmem %s6, 16
        %v708 = vld [vmem:[%s707] sm:$0xff]
        %s709 = scalar_lea.vmem %s3, 6
        %v710 = vld [vmem:[%s709] sm:$0x3]
        %s711 = scalar_lea.vmem %s4, 6
        %v712 = vld [vmem:[%s711] sm:$0x3]
        %s713 = scalar_lea.vmem %s5, 24
        %v714 = vld [vmem:[%s713] sm:$0xff]
        %s715 = scalar_lea.vmem %s6, 24
        %v716 = vld [vmem:[%s715] sm:$0xff]
        %v718 = vsel %vm357, %v710, 0
        %720 = vmatprep.subr.mxu0 0.0
        %721 = vmatpush1.msra.mxu0 %v700
        %722 = vmatprep.subr.mxu0 0.0
        %723 = vmatpush1.msra.mxu0 0.0
        %724 = vmatprep.subr.mxu0 0.0
        %725 = vmatpush1.msra.mxu0 0.0
        %726 = vmatprep.subr.mxu0 0.0
        %727 = vmatpush1.msra.mxu0 0.0
        %728 = vmatprep.subr.mxu0 0.0
        %729 = vmatpush1.msra.mxu0 0.0
        %730 = vmatprep.subr.mxu0 0.0
        %731 = vmatpush1.msra.mxu0 0.0
        %732 = vmatprep.subr.mxu0 0.0
        %733 = vmatpush1.msra.mxu0 0.0
        %734 = vmatprep.subr.mxu0 0.0
        %735 = vmatpush1.msra.mxu0 0.0
        %736 = vmatprep.subr.mxu0 0.0
        %737 = vmatpush1.msra.mxu0 0.0
        %738 = vmatprep.subr.mxu0 0.0
        %739 = vmatpush1.msra.mxu0 0.0
        %740 = vmatprep.subr.mxu0 0.0
        %741 = vmatpush1.msra.mxu0 0.0
        %742 = vmatprep.subr.mxu0 0.0
        %743 = vmatpush1.msra.mxu0 0.0
        %744 = vmatprep.subr.mxu0 0.0
        %745 = vmatpush1.msra.mxu0 0.0
        %746 = vmatprep.subr.mxu0 0.0
        %747 = vmatpush1.msra.mxu0 0.0
        %748 = vmatprep.subr.mxu0 0.0
        %749 = vmatpush1.msra.mxu0 0.0
        %750 = vmatprep.subr.mxu0 0.0
        %751 = vmatpush1.msra.mxu0 0.0
        %752 = vmatprep.subr.mxu0 0.0
        %753 = vmatpush1.msra.mxu0 0.0
        %754 = vmatprep.subr.mxu0 0.0
        %755 = vmatpush1.msra.mxu0 0.0
        %756 = vmatprep.subr.mxu0 0.0
        %757 = vmatpush1.msra.mxu0 0.0
        %758 = vmatprep.subr.mxu0 0.0
        %759 = vmatpush1.msra.mxu0 0.0
        %760 = vmatprep.subr.mxu0 0.0
        %761 = vmatpush1.msra.mxu0 0.0
        %762 = vmatprep.subr.mxu0 0.0
        %763 = vmatpush1.msra.mxu0 0.0
        %764 = vmatprep.subr.mxu0 0.0
        %765 = vmatpush1.msra.mxu0 0.0
        %766 = vmatprep.subr.mxu0 0.0
        %767 = vmatpush1.msra.mxu0 0.0
        %768 = vmatprep.subr.mxu0 0.0
        %769 = vmatpush1.msra.mxu0 0.0
        %770 = vmatprep.subr.mxu0 0.0
        %771 = vmatpush1.msra.mxu0 0.0
        %772 = vmatprep.subr.mxu0 0.0
        %773 = vmatpush1.msra.mxu0 0.0
        %774 = vmatprep.subr.mxu0 0.0
        %775 = vmatpush1.msra.mxu0 0.0
        %776 = vmatprep.subr.mxu0 0.0
        %777 = vmatpush1.msra.mxu0 0.0
        %778 = vmatprep.subr.mxu0 0.0
        %779 = vmatpush1.msra.mxu0 0.0
        %780 = vmatprep.subr.mxu0 0.0
        %781 = vmatpush1.msra.mxu0 0.0
        %782 = vmatprep.subr.mxu0 0.0
        %783 = vmatpush1.msra.mxu0 0.0
        %784 = vmatprep.mubr.f32.mxu0 0.0
        %785 = vmatmul.mubr.f32.gmra.mrb[0].mxu0 %v718
        %v786 = vpop.f32.mrb[0].mxu0
        %v787 = vadd.f32 %v712, %v786
        %v788 = vpop.f32.mrb[0].mxu0
        %789 = vdwg.mxu0
        %v790 = vmax.f32 %v787, 0.0
        %v792 = vsel %vm432, %v714, 0
        %v795 = vsel %vm436, %v790, 0
        %797 = vmatprep.subr.mxu0 0.0
        %798 = vmatpush1.msra.mxu0 %v795
        %799 = vmatprep.subr.mxu0 0.0
        %800 = vmatpush1.msra.mxu0 0.0
        %801 = vmatprep.subr.mxu0 0.0
        %802 = vmatpush1.msra.mxu0 0.0
        %803 = vmatprep.subr.mxu0 0.0
        %804 = vmatpush1.msra.mxu0 0.0
        %805 = vmatprep.subr.mxu0 0.0
        %806 = vmatpush1.msra.mxu0 0.0
        %807 = vmatprep.subr.mxu0 0.0
        %808 = vmatpush1.msra.mxu0 0.0
        %809 = vmatprep.subr.mxu0 0.0
        %810 = vmatpush1.msra.mxu0 0.0
        %811 = vmatprep.subr.mxu0 0.0
        %812 = vmatpush1.msra.mxu0 0.0
        %813 = vmatprep.subr.mxu0 0.0
        %814 = vmatpush1.msra.mxu0 0.0
        %815 = vmatprep.subr.mxu0 0.0
        %816 = vmatpush1.msra.mxu0 0.0
        %817 = vmatprep.subr.mxu0 0.0
        %818 = vmatpush1.msra.mxu0 0.0
        %819 = vmatprep.subr.mxu0 0.0
        %820 = vmatpush1.msra.mxu0 0.0
        %821 = vmatprep.subr.mxu0 0.0
        %822 = vmatpush1.msra.mxu0 0.0
        %823 = vmatprep.subr.mxu0 0.0
        %824 = vmatpush1.msra.mxu0 0.0
        %825 = vmatprep.subr.mxu0 0.0
        %826 = vmatpush1.msra.mxu0 0.0
        %827 = vmatprep.subr.mxu0 0.0
        %828 = vmatpush1.msra.mxu0 0.0
        %829 = vmatprep.subr.mxu0 0.0
        %830 = vmatpush1.msra.mxu0 0.0
        %831 = vmatprep.subr.mxu0 0.0
        %832 = vmatpush1.msra.mxu0 0.0
        %833 = vmatprep.subr.mxu0 0.0
        %834 = vmatpush1.msra.mxu0 0.0
        %835 = vmatprep.subr.mxu0 0.0
        %836 = vmatpush1.msra.mxu0 0.0
        %837 = vmatprep.subr.mxu0 0.0
        %838 = vmatpush1.msra.mxu0 0.0
        %839 = vmatprep.subr.mxu0 0.0
        %840 = vmatpush1.msra.mxu0 0.0
        %841 = vmatprep.subr.mxu0 0.0
        %842 = vmatpush1.msra.mxu0 0.0
        %843 = vmatprep.subr.mxu0 0.0
        %844 = vmatpush1.msra.mxu0 0.0
        %845 = vmatprep.subr.mxu0 0.0
        %846 = vmatpush1.msra.mxu0 0.0
        %847 = vmatprep.subr.mxu0 0.0
        %848 = vmatpush1.msra.mxu0 0.0
        %849 = vmatprep.subr.mxu0 0.0
        %850 = vmatpush1.msra.mxu0 0.0
        %851 = vmatprep.subr.mxu0 0.0
        %852 = vmatpush1.msra.mxu0 0.0
        %853 = vmatprep.subr.mxu0 0.0
        %854 = vmatpush1.msra.mxu0 0.0
        %855 = vmatprep.subr.mxu0 0.0
        %856 = vmatpush1.msra.mxu0 0.0
        %857 = vmatprep.subr.mxu0 0.0
        %858 = vmatpush1.msra.mxu0 0.0
        %859 = vmatprep.subr.mxu0 0.0
        %860 = vmatpush1.msra.mxu0 0.0
        %861 = vmatprep.mubr.f32.mxu0 0.0
        %862 = vmatmul.mubr.f32.gmra.mrb[0].mxu0 %v792
        %v863 = vpop.f32.mrb[0].mxu0
        %v864 = vadd.f32 %v716, %v863
        %v865 = vpop.f32.mrb[0].mxu0
        %866 = vdwg.mxu0
        %868 = vset.pattern.permute.xlu0 0
        %869 = vperm.xlu0 %868, %v704
        %v870 = vpop.permute.xlu0 %869
        %v873 = vsel %vm357, %v702, 0
        %875 = vmatprep.subr.mxu0 %v696
        %876 = vmatpush1.msra.mxu0 %v695
        %877 = vmatprep.subr.mxu0 0.0
        %878 = vmatpush1.msra.mxu0 0.0
        %879 = vmatprep.subr.mxu0 0.0
        %880 = vmatpush1.msra.mxu0 0.0
        %881 = vmatprep.subr.mxu0 0.0
        %882 = vmatpush1.msra.mxu0 0.0
        %883 = vmatprep.subr.mxu0 0.0
        %884 = vmatpush1.msra.mxu0 0.0
        %885 = vmatprep.subr.mxu0 0.0
        %886 = vmatpush1.msra.mxu0 0.0
        %887 = vmatprep.subr.mxu0 0.0
        %888 = vmatpush1.msra.mxu0 0.0
        %889 = vmatprep.subr.mxu0 0.0
        %890 = vmatpush1.msra.mxu0 0.0
        %891 = vmatprep.subr.mxu0 0.0
        %892 = vmatpush1.msra.mxu0 0.0
        %893 = vmatprep.subr.mxu0 0.0
        %894 = vmatpush1.msra.mxu0 0.0
        %895 = vmatprep.subr.mxu0 0.0
        %896 = vmatpush1.msra.mxu0 0.0
        %897 = vmatprep.subr.mxu0 0.0
        %898 = vmatpush1.msra.mxu0 0.0
        %899 = vmatprep.subr.mxu0 0.0
        %900 = vmatpush1.msra.mxu0 0.0
        %901 = vmatprep.subr.mxu0 0.0
        %902 = vmatpush1.msra.mxu0 0.0
        %903 = vmatprep.subr.mxu0 0.0
        %904 = vmatpush1.msra.mxu0 0.0
        %905 = vmatprep.subr.mxu0 0.0
        %906 = vmatpush1.msra.mxu0 0.0
        %907 = vmatprep.subr.mxu0 0.0
        %908 = vmatpush1.msra.mxu0 0.0
        %909 = vmatprep.subr.mxu0 0.0
        %910 = vmatpush1.msra.mxu0 0.0
        %911 = vmatprep.subr.mxu0 0.0
        %912 = vmatpush1.msra.mxu0 0.0
        %913 = vmatprep.subr.mxu0 0.0
        %914 = vmatpush1.msra.mxu0 0.0
        %915 = vmatprep.subr.mxu0 0.0
        %916 = vmatpush1.msra.mxu0 0.0
        %917 = vmatprep.subr.mxu0 0.0
        %918 = vmatpush1.msra.mxu0 0.0
        %919 = vmatprep.subr.mxu0 0.0
        %920 = vmatpush1.msra.mxu0 0.0
        %921 = vmatprep.subr.mxu0 0.0
        %922 = vmatpush1.msra.mxu0 0.0
        %923 = vmatprep.subr.mxu0 0.0
        %924 = vmatpush1.msra.mxu0 0.0
        %925 = vmatprep.subr.mxu0 0.0
        %926 = vmatpush1.msra.mxu0 0.0
        %927 = vmatprep.subr.mxu0 0.0
        %928 = vmatpush1.msra.mxu0 0.0
        %929 = vmatprep.subr.mxu0 0.0
        %930 = vmatpush1.msra.mxu0 0.0
        %931 = vmatprep.subr.mxu0 0.0
        %932 = vmatpush1.msra.mxu0 0.0
        %933 = vmatprep.subr.mxu0 0.0
        %934 = vmatpush1.msra.mxu0 0.0
        %935 = vmatprep.subr.mxu0 0.0
        %936 = vmatpush1.msra.mxu0 0.0
        %937 = vmatprep.subr.mxu0 0.0
        %938 = vmatpush1.msra.mxu0 0.0
        %939 = vmatprep.mubr.f32.mxu0 0.0
        %940 = vmatmul.mubr.f32.gmra.mrb[0].mxu0 %v873
        %v941 = vpop.f32.mrb[0].mxu0
        %v942 = vadd.f32 %v870, %v941
        %v943 = vpop.f32.mrb[0].mxu0
        %v944 = vadd.f32 %v870, %v943
        %945 = vdwg.mxu0
        %v946 = vmax.f32 %v942, 0.0
        %v947 = vmax.f32 %v944, 0.0
        %v948 = vadd.f32 %v708, %v864
        %950 = vset.pattern.permute.xlu0 0
        %951 = vperm.xlu0 %950, %v948
        %v952 = vpop.permute.xlu0 %951
        %v955 = vsel %vm432, %v706, 0
        %v958 = vsel %vm436, %v946, 0
        %v961 = vsel %vm436, %v947, 0
        %963 = vmatprep.subr.mxu0 %v961
        %964 = vmatpush1.msra.mxu0 %v958
        %965 = vmatprep.subr.mxu0 0.0
        %966 = vmatpush1.msra.mxu0 0.0
        %967 = vmatprep.subr.mxu0 0.0
        %968 = vmatpush1.msra.mxu0 0.0
        %969 = vmatprep.subr.mxu0 0.0
        %970 = vmatpush1.msra.mxu0 0.0
        %971 = vmatprep.subr.mxu0 0.0
        %972 = vmatpush1.msra.mxu0 0.0
        %973 = vmatprep.subr.mxu0 0.0
        %974 = vmatpush1.msra.mxu0 0.0
        %975 = vmatprep.subr.mxu0 0.0
        %976 = vmatpush1.msra.mxu0 0.0
        %977 = vmatprep.subr.mxu0 0.0
        %978 = vmatpush1.msra.mxu0 0.0
        %979 = vmatprep.subr.mxu0 0.0
        %980 = vmatpush1.msra.mxu0 0.0
        %981 = vmatprep.subr.mxu0 0.0
        %982 = vmatpush1.msra.mxu0 0.0
        %983 = vmatprep.subr.mxu0 0.0
        %984 = vmatpush1.msra.mxu0 0.0
        %985 = vmatprep.subr.mxu0 0.0
        %986 = vmatpush1.msra.mxu0 0.0
        %987 = vmatprep.subr.mxu0 0.0
        %988 = vmatpush1.msra.mxu0 0.0
        %989 = vmatprep.subr.mxu0 0.0
        %990 = vmatpush1.msra.mxu0 0.0
        %991 = vmatprep.subr.mxu0 0.0
        %992 = vmatpush1.msra.mxu0 0.0
        %993 = vmatprep.subr.mxu0 0.0
        %994 = vmatpush1.msra.mxu0 0.0
        %995 = vmatprep.subr.mxu0 0.0
        %996 = vmatpush1.msra.mxu0 0.0
        %997 = vmatprep.subr.mxu0 0.0
        %998 = vmatpush1.msra.mxu0 0.0
        %999 = vmatprep.subr.mxu0 0.0
        %1000 = vmatpush1.msra.mxu0 0.0
        %1001 = vmatprep.subr.mxu0 0.0
        %1002 = vmatpush1.msra.mxu0 0.0
        %1003 = vmatprep.subr.mxu0 0.0
        %1004 = vmatpush1.msra.mxu0 0.0
        %1005 = vmatprep.subr.mxu0 0.0
        %1006 = vmatpush1.msra.mxu0 0.0
        %1007 = vmatprep.subr.mxu0 0.0
        %1008 = vmatpush1.msra.mxu0 0.0
        %1009 = vmatprep.subr.mxu0 0.0
        %1010 = vmatpush1.msra.mxu0 0.0
        %1011 = vmatprep.subr.mxu0 0.0
        %1012 = vmatpush1.msra.mxu0 0.0
        %1013 = vmatprep.subr.mxu0 0.0
        %1014 = vmatpush1.msra.mxu0 0.0
        %1015 = vmatprep.subr.mxu0 0.0
        %1016 = vmatpush1.msra.mxu0 0.0
        %1017 = vmatprep.subr.mxu0 0.0
        %1018 = vmatpush1.msra.mxu0 0.0
        %1019 = vmatprep.subr.mxu0 0.0
        %1020 = vmatpush1.msra.mxu0 0.0
        %1021 = vmatprep.subr.mxu0 0.0
        %1022 = vmatpush1.msra.mxu0 0.0
        %1023 = vmatprep.subr.mxu0 0.0
        %1024 = vmatpush1.msra.mxu0 0.0
        %1025 = vmatprep.subr.mxu0 0.0
        %1026 = vmatpush1.msra.mxu0 0.0
        %1027 = vmatprep.mubr.f32.mxu0 0.0
        %1028 = vmatmul.mubr.f32.gmra.mrb[0].mxu0 %v955
        %v1029 = vpop.f32.mrb[0].mxu0
        %v1030 = vadd.f32 %v952, %v1029
        %v1031 = vpop.f32.mrb[0].mxu0
        %v1032 = vadd.f32 %v952, %v1031
        %1033 = vdwg.mxu0
        %v1034 = vmul.f32 %v1030, 0.5
        %v1035 = vmul.f32 %v1032, 0.5
        %v1036 = vtanh.pop %v1034
        %v1037 = vtanh.pop %v1035
        %v1038 = vadd.f32 %v1036, 1.0
        %v1039 = vadd.f32 %v1037, 1.0
        %v1040 = vmul.f32 %v1038, 0.5
        %v1041 = vmul.f32 %v1039, 0.5
        %v1042 = vsub.f32 %v693, %v691
        %v1043 = vsub.f32 %v694, %v692
        %v1044 = vmul.f32 %v1040, %v1042
        %v1045 = vmul.f32 %v1041, %v1043
        %v1046 = vadd.f32 %v691, %v1044
        %v1047 = vadd.f32 %v692, %v1045
        %v1048 = vmul.f32 %v1046, 2.0
        %v1049 = vmul.f32 %v1047, 2.0
        %1050 = vst [vmem:[%s324] sm:$0xff] %v1048
        %1051 = vst [vmem:[%s324 + $0x8] sm:$0xff] %v1049
        %s1052 = sand.u32 %s194, 1
        %s1053 = scalar_lea.sflag [#allocation4], %s1052
        %s1054 = sand.u32 %s194, 1
        %s1055 = smul.addr %s1054, 16
        %s1056 = scalar_lea.vmem [#allocation5], %s1055
        // Predicated region
        $region53: #{tpu_custom_call.1} parent=47 // pred_check
          %p1057 = pneg %p204
        $region54: #{tpu_custom_call.1} parent=47 // pred_check_branch
          %1059 = sbr.rel (%p1057) target = $region56
        $region55: #{tpu_custom_call.1} parent=47 // pred_region
          %s1061 = ssub.s32 256, 256
          %1062 = vsyncadd %s1053, %s1061
          %s1063 = smul.addr %s24, 2
          %s1064 = smul.addr %s1063, 128
          %s1065 = scalar_lea.hbm %s7, %s1064
          %s1067 = sshll.u32 %s1056, 4
          %s1068 = int_to_ptr.vmem [resolvable:$true] %s1067
          %1070 = dma.vmem_to_hbm [thread:$0]  %s1068, 256, %s1065, %s1053
        $region56: #{tpu_custom_call.1} parent=47 // pred_fallthru
          _
      $region48: #{tpu_custom_call.1} parent=5 // pred_fallthru
        _
      %p1071 = scmp.le.s32.totalorder 2, %s19
      // Predicated region
      $region57: #{tpu_custom_call.1} parent=5 // pred_check
        %p1072 = pneg %p1071
      $region58: #{tpu_custom_call.1} parent=5 // pred_check_branch
        %1074 = sbr.rel (%p1072) target = $region60
      $region59: #{tpu_custom_call.1} parent=5 // pred_region
        %s1075 = ssub.s32 %s19, 2
        // Predicated region
        $region61: #{tpu_custom_call.1} parent=59 // pred_check
          %p1076 = pneg %p210
        $region62: #{tpu_custom_call.1} parent=59 // pred_check_branch
          %1078 = sbr.rel (%p1076) target = $region64
        $region63: #{tpu_custom_call.1} parent=59 // pred_region
          %s1079 = sand.u32 %s195, 1
          %s1080 = scalar_lea.sflag [#allocation4], %s1079
          %s1081 = sand.u32 %s195, 1
          %s1082 = smul.addr %s1081, 16
          %s1083 = scalar_lea.vmem [#allocation5], %s1082
          %1084 = dma.done %s1080, 256
        $region64: #{tpu_custom_call.1} parent=59 // pred_fallthru
          _
      $region60: #{tpu_custom_call.1} parent=5 // pred_fallthru
        _
    $region6: #{tpu_custom_call.1} parent=1 // loop_footer
      %s23 = sadd.s32 1, %s19
    $region7: #{tpu_custom_call.1} parent=1 // loop_footer_branch
      %18 = sbr.rel target = $region3
    $region8: #{tpu_custom_call.1} parent=1 // loop_exit
      _
    %1085 = vsyncpa [#allocation3], 1
    %s1086 = scalar_lea.sflag [#allocation3], 1
    %1087 = vsyncpa %s1086, 1
    %1088 = vsyncpa [#allocation4], 1
    %s1089 = scalar_lea.sflag [#allocation4], 1
    %1090 = vsyncpa %s1089, 1

</llo_original>
